<compile_context>
chip_gen: v7x
topology: tpu7x:2x2x1
jax: 0.10.0
libtpu: 0.0.40
codegen_flags: <defaults>
</compile_context>

<pallas_src>
import jax
import jax.numpy as jnp
import numpy as np
from jax import lax
from jax.experimental import pallas as pl
from jax.experimental.pallas import tpu as pltpu

LANE = 128        # decoder / merged-conv output lanes -> unmasked vst
NEG_INF = -1e30   # finite "minus infinity" for max-pool masking


# ----------------------------------------------------------------------------
# Fused Pallas kernel: V-tiled embedding + merged conv + pool + decoder
# ----------------------------------------------------------------------------
def _make_fused_kernel(kernel_sizes, L, E):
    k_min, k_max = min(kernel_sizes), max(kernel_sizes)
    l_out = L - k_min + 1
    pad_rows = k_max - k_min

    def kernel(tok_ref, emb_ref, wcol_ref, bias_ref, mask_ref,
               dec_w_ref, dec_b_ref, o_ref, x_acc):
        v = pl.program_id(0)

        @pl.when(v == 0)
        def _init():
            x_acc[...] = jnp.zeros_like(x_acc)

        # ---- embedding: accumulate one V-tile of the one-hot MXU matmul ----
        tok = tok_ref[...]                       # (B, L, 1) int32
        emb_tile = emb_ref[...]                  # (TV, E)   bf16
        B = tok.shape[0]
        TV = emb_tile.shape[0]
        iota_v = lax.broadcasted_iota(jnp.int32, (B, L, TV), 2) + v * TV
        onehot = jnp.where(tok == iota_v, 1.0, 0.0).astype(jnp.bfloat16)
        x_acc[...] += lax.dot_general(           # (B, L, E) f32 accumulate
            onehot, emb_tile,
            dimension_numbers=(((2,), (0,)), ((), ())),
            preferred_element_type=jnp.float32)

        # ---- merged conv + pool + decoder, only on the last V-tile ----
        @pl.when(v == pl.num_programs(0) - 1)
        def _epilogue():
            x = x_acc[...]                       # (B, L, E) f32 (exact bf16 rows)
            if pad_rows:
                x = jnp.concatenate(
                    [x, jnp.zeros((B, pad_rows, E), jnp.float32)], axis=1)
            # Shared im2col for the widest kernel: k_max shifted slices.
            xcol = jnp.concatenate(
                [x[:, j:j + l_out, :] for j in range(k_max)], axis=-1)
            xcol = xcol.astype(jnp.bfloat16)     # exact: values are bf16 table rows
            y = lax.dot_general(                 # (B, l_out, LANE) f32
                xcol, wcol_ref[...],
                dimension_numbers=(((2,), (0,)), ((), ())),
                preferred_element_type=jnp.float32)
            # Mask invalid tail rows of narrower branches, global max pool,
            # then bias + ReLU (both commute with the max).
            pooled = jnp.max(y + mask_ref[...][None, :, :], axis=1)   # (B, LANE)
            enc = jnp.maximum(pooled + bias_ref[...], 0.0)
            o_ref[...] = (
                jnp.dot(enc, dec_w_ref[...].astype(jnp.float32),
                        preferred_element_type=jnp.float32)
                + dec_b_ref[...])

    return kernel


# ----------------------------------------------------------------------------
# Wrapper: single pallas_call for the whole forward pass
# ----------------------------------------------------------------------------
def textcnn_forward(params, sentence, *, v_tile=128):
    kernel_sizes = tuple(params["kernel_sizes"])
    emb = params["embedding"]                  # (V, E) f32
    conv_ws = params["conv_w"]                 # list of (k, E, C)
    conv_bs = params["conv_b"]                 # list of (1, C)
    dec_w = params["dec_w"]                    # (sum(C), n_out)
    dec_b = params["dec_b"]                    # (1, n_out)

    B, L = sentence.shape
    V, E = emb.shape
    n_out = dec_w.shape[-1]
    k_min, k_max = min(kernel_sizes), max(kernel_sizes)
    channels = [int(w.shape[-1]) for w in conv_ws]
    sum_c = sum(channels)
    l_out = L - k_min + 1
    if L < k_max:
        raise ValueError("sequence length shorter than the widest conv kernel")
    if sum_c > LANE or n_out > LANE:
        raise NotImplementedError("decoder wider than one 128-lane tile")

    v_grid = -(-V // v_tile)
    v_pad = v_grid * v_tile

    # ---- wrapper-side (XLA) weight prep: bf16 cast, merged im2col layout,
    #      lane / row zero-padding.  NOTE: token ids are assumed in [0, V);
    #      out-of-range ids select a zero (padded) row instead of raising
    #      like torch.nn.Embedding. ----
    emb_p = jnp.zeros((v_pad, E), jnp.bfloat16).at[:V, :].set(
        emb.astype(jnp.bfloat16))

    wcol = jnp.zeros((k_max * E, LANE), jnp.bfloat16)     # merged conv weights
    bias = jnp.zeros((1, LANE), jnp.float32)              # merged conv bias
    mask_np = np.zeros((l_out, LANE), np.float32)         # -inf tail mask
    off = 0
    for w, b, k in zip(conv_ws, conv_bs, kernel_sizes):
        c = w.shape[-1]
        wcol = wcol.at[:k * E, off:off + c].set(
            w.astype(jnp.bfloat16).reshape(k * E, c))
        bias = bias.at[:, off:off + c].set(b.astype(jnp.float32))
        mask_np[L - k + 1:, off:off + c] = NEG_INF        # invalid l_out rows
        off += c
    mask = jnp.asarray(mask_np)

    dec_w_p = jnp.zeros((LANE, LANE), jnp.bfloat16).at[:sum_c, :n_out].set(
        dec_w.astype(jnp.bfloat16))
    dec_b_p = jnp.zeros((1, LANE), jnp.float32).at[:, :n_out].set(dec_b)

    tok = sentence.astype(jnp.int32)[:, :, None]          # (B, L, 1)

    kernel = _make_fused_kernel(kernel_sizes, L, E)

    flops = (2 * B * L * v_pad * E                        # one-hot embedding
             + 2 * B * l_out * (k_max * E) * LANE         # merged conv branches
             + 2 * B * LANE * LANE)                       # decoder
    bytes_accessed = (tok.size * 4 + emb_p.size * 2 + wcol.size * 2
                      + bias.size * 4 + mask.size * 4 + dec_w_p.size * 2
                      + dec_b_p.size * 4 + B * LANE * 4)

    def build(single_buffer):
        def spec(shape, imap, invariant):
            if single_buffer and invariant:
                return pl.BlockSpec(shape, imap, pipeline_mode=pl.Buffered(1))
            return pl.BlockSpec(shape, imap)

        in_specs = [
            spec((B, L, 1), lambda v: (0, 0, 0), True),          # token ids
            spec((v_tile, E), lambda v: (v, 0), False),          # emb V-tile
            spec((k_max * E, LANE), lambda v: (0, 0), True),     # merged conv W
            spec((1, LANE), lambda v: (0, 0), True),             # merged conv b
            spec((l_out, LANE), lambda v: (0, 0), True),         # tail mask
            spec((LANE, LANE), lambda v: (0, 0), True),          # decoder W
            spec((1, LANE), lambda v: (0, 0), True),             # decoder b
        ]
        # TODO(synk): when B/L grow, add a leading "parallel" B-tile grid axis
        # (v7x megacore) and re-budget the tiles against 64 MiB VMEM.
        return pl.pallas_call(
            kernel,
            out_shape=jax.ShapeDtypeStruct((B, LANE), jnp.float32),
            grid=(v_grid,),
            in_specs=in_specs,
            out_specs=pl.BlockSpec((B, LANE), lambda v: (0, 0)),
            scratch_shapes=[pltpu.VMEM((B, L, E), jnp.float32)],
            compiler_params=pltpu.CompilerParams(
                dimension_semantics=("arbitrary",)),
            cost_estimate=pl.CostEstimate(
                flops=flops, transcendentals=0, bytes_accessed=bytes_accessed),
        )

    args = (tok, emb_p, wcol, bias, mask, dec_w_p, dec_b_p)
    try:
        logits_p = build(single_buffer=True)(*args)
    except Exception:
        # pipeline_mode=pl.Buffered(1) (skip double-buffering of grid-invariant
        # inputs) is not accepted by every JAX release; default buffering is
        # functionally identical, it just uses a bit more VMEM.
        logits_p = build(single_buffer=False)(*args)

    # TODO(synk): nn.Dropout(0.5) is identity at inference; training mask omitted.
    return logits_p[:, :n_out]


# ----------------------------------------------------------------------------
# Pure-JAX reference (torch-equivalent NCL Conv1d) with the same bf16 weight
# quantization and f32 accumulation, for correctness checking.
# ----------------------------------------------------------------------------
def textcnn_ref(params, sentence):
    emb = params["embedding"].astype(jnp.bfloat16)
    x = jnp.transpose(emb[sentence], (0, 2, 1))            # (B, E, L) bf16
    feats = []
    for w, b in zip(params["conv_w"], params["conv_b"]):
        w_oiw = jnp.transpose(w.astype(jnp.bfloat16), (2, 1, 0))   # (C, E, k)
        y = lax.conv_general_dilated(
            x, w_oiw, window_strides=(1,), padding="VALID",
            dimension_numbers=("NCH", "OIH", "NCH"),
            preferred_element_type=jnp.float32)
        y = jnp.maximum(y + b[0][None, :, None], 0.0)
        feats.append(jnp.max(y, axis=-1))
    enc = jnp.concatenate(feats, axis=1)                   # (B, sum(C)) f32
    dec_w = params["dec_w"].astype(jnp.bfloat16).astype(jnp.float32)
    return enc @ dec_w + params["dec_b"][0]


# ----------------------------------------------------------------------------
# Deterministic parameter init + demo
# ----------------------------------------------------------------------------
def init_params(key, vocab_size, embedding_dim, kernel_sizes, num_channels):
    keys = jax.random.split(key, 3 + 2 * len(kernel_sizes))
    params = {
        "embedding": 0.1 * jax.random.normal(
            keys[0], (vocab_size, embedding_dim), jnp.float32),
        "kernel_sizes": tuple(kernel_sizes),
        "conv_w": [],
        "conv_b": [],
    }
    for i, (c, k) in enumerate(zip(num_channels, kernel_sizes)):
        params["conv_w"].append(0.1 * jax.random.normal(
            keys[1 + 2 * i], (k, embedding_dim, c), jnp.float32))
        params["conv_b"].append(0.1 * jax.random.normal(
            keys[2 + 2 * i], (1, c), jnp.float32))
    f = sum(num_channels)
    params["dec_w"] = 0.1 * jax.random.normal(keys[-2], (f, 3), jnp.float32)
    params["dec_b"] = 0.1 * jax.random.normal(keys[-1], (1, 3), jnp.float32)
    return params


if __name__ == "__main__":
    vocab_size = 50
    embedding_dim = 32
    kernel_sizes = (3, 4, 5)
    num_channels = (16, 16, 16)
    batch, seq_len = 2, 16

    key = jax.random.PRNGKey(0)
    k_param, k_tok = jax.random.split(key)
    params = init_params(k_param, vocab_size, embedding_dim,
                         kernel_sizes, num_channels)
    sentence = jax.random.randint(k_tok, (batch, seq_len), 0, vocab_size,
                                  dtype=jnp.int32)

    out = textcnn_forward(params, sentence)
    out = jax.block_until_ready(out)

    ref = textcnn_ref(params, sentence)
    # bf16 weights / f32 accumulation in both kernel and reference; only the
    # summation order differs, so 1e-3 is a comfortable bound.
    np.testing.assert_allclose(np.asarray(out), np.asarray(ref),
                               rtol=1e-3, atol=1e-3)
    assert out.shape == (batch, 3)
    print("KERNEL_OK")
</pallas_src>

<mosaic_0001>
module attributes {stable_mosaic.version = 11 : i64} {
  func.func @kernel(%arg0: i32, %arg1: memref<2x16x1xi32, #tpu.memory_space<vmem>>, %arg2: memref<128x32xbf16, #tpu.memory_space<vmem>>, %arg3: memref<160x128xbf16, #tpu.memory_space<vmem>>, %arg4: memref<1x128xf32, #tpu.memory_space<vmem>>, %arg5: memref<14x128xf32, #tpu.memory_space<vmem>>, %arg6: memref<128x128xbf16, #tpu.memory_space<vmem>>, %arg7: memref<1x128xf32, #tpu.memory_space<vmem>>, %arg8: memref<2x128xf32, #tpu.memory_space<vmem>>, %arg9: memref<2x16x32xf32, #tpu.memory_space<vmem>>) attributes {dimension_semantics = [#tpu.dimension_semantics<arbitrary>], iteration_bounds = array<i64: 1>, scalar_prefetch = 0 : i64, scratch_operands = 1 : i64, tpu.core_type = #tpu.core_type<tc>, window_params = [{pipeline_mode = #tpu.pipeline_mode<synchronous>, transform_indices = @transform_0, window_bounds = array<i64: 2, 16, 1>}, {transform_indices = @transform_1, window_bounds = array<i64: 128, 32>}, {pipeline_mode = #tpu.pipeline_mode<synchronous>, transform_indices = @transform_2, window_bounds = array<i64: 160, 128>}, {pipeline_mode = #tpu.pipeline_mode<synchronous>, transform_indices = @transform_3, window_bounds = array<i64: 1, 128>}, {pipeline_mode = #tpu.pipeline_mode<synchronous>, transform_indices = @transform_4, window_bounds = array<i64: 14, 128>}, {pipeline_mode = #tpu.pipeline_mode<synchronous>, transform_indices = @transform_5, window_bounds = array<i64: 128, 128>}, {pipeline_mode = #tpu.pipeline_mode<synchronous>, transform_indices = @transform_6, window_bounds = array<i64: 1, 128>}, {pipeline_mode = #tpu.pipeline_mode<synchronous>, transform_indices = @transform_7, window_bounds = array<i64: 2, 128>}]} {
    %c0_i32 = arith.constant 0 : i32
    %0 = arith.cmpi eq, %arg0, %c0_i32 : i32
    %1 = arith.extui %0 : i1 to i32
    %c0_i32_0 = arith.constant 0 : i32
    %2 = arith.cmpi ne, %1, %c0_i32_0 : i32
    scf.if %2 {
      %cst_15 = arith.constant 0.000000e+00 : f32
      %22 = vector.broadcast %cst_15 : f32 to vector<2x16x32xf32>
      %c0_16 = arith.constant 0 : index
      %c0_17 = arith.constant 0 : index
      %c0_18 = arith.constant 0 : index
      %23 = vector.load %arg9[%c0_16, %c0_17, %c0_18] : memref<2x16x32xf32, #tpu.memory_space<vmem>>, vector<2x16x32xf32>
      tpu.vector_store %arg9[%c0_16, %c0_17, %c0_18], %22 {strides = array<i32>} : memref<2x16x32xf32, #tpu.memory_space<vmem>>, vector<2x16x32xf32>,
    } else {
    }
    %c0 = arith.constant 0 : index
    %c0_1 = arith.constant 0 : index
    %c0_2 = arith.constant 0 : index
    %3 = vector.load %arg1[%c0, %c0_1, %c0_2] : memref<2x16x1xi32, #tpu.memory_space<vmem>>, vector<2x16x1xi32>
    %c0_3 = arith.constant 0 : index
    %c0_4 = arith.constant 0 : index
    %4 = vector.load %arg2[%c0_3, %c0_4] : memref<128x32xbf16, #tpu.memory_space<vmem>>, vector<128x32xbf16>
    %5 = tpu.iota {dimensions = array<i32: 2>} : vector<2x16x128xi32>
    %c128_i32 = arith.constant 128 : i32
    %6 = arith.muli %arg0, %c128_i32 : i32
    %7 = vector.broadcast %6 : i32 to vector<2x16x128xi32>
    %8 = arith.addi %5, %7 : vector<2x16x128xi32>
    %9 = vector.broadcast %3 : vector<2x16x1xi32> to vector<2x16x128xi32>
    %10 = arith.cmpi eq, %9, %8 : vector<2x16x128xi32>
    %cst = arith.constant 1.000000e+00 : f32
    %cst_5 = arith.constant 0.000000e+00 : f32
    %11 = vector.broadcast %cst : f32 to vector<2x16x128xf32>
    %12 = vector.broadcast %cst_5 : f32 to vector<2x16x128xf32>
    %13 = arith.select %10, %11, %12 : vector<2x16x128xi1>, vector<2x16x128xf32>
    %14 = arith.truncf %13 : vector<2x16x128xf32> to vector<2x16x128xbf16>
    %c0_6 = arith.constant 0 : index
    %c0_7 = arith.constant 0 : index
    %c0_8 = arith.constant 0 : index
    %15 = vector.load %arg9[%c0_6, %c0_7, %c0_8] : memref<2x16x32xf32, #tpu.memory_space<vmem>>, vector<2x16x32xf32>
    %cst_9 = arith.constant dense<0.000000e+00> : vector<2x16x32xf32>
    %16 = tpu.matmul %14, %4, %cst_9 {dimension_numbers = #tpu.dot_dimension_numbers<[2], [0], [0, 1], [1], [0, 0, 0, 1, 1, 1], [], []>} : vector<2x16x128xbf16>, vector<128x32xbf16>, vector<2x16x32xf32> -> vector<2x16x32xf32>
    %17 = arith.addf %15, %16 : vector<2x16x32xf32>
    %c0_10 = arith.constant 0 : index
    %c0_11 = arith.constant 0 : index
    %c0_12 = arith.constant 0 : index
    %18 = vector.load %arg9[%c0_10, %c0_11, %c0_12] : memref<2x16x32xf32, #tpu.memory_space<vmem>>, vector<2x16x32xf32>
    tpu.vector_store %arg9[%c0_10, %c0_11, %c0_12], %17 {strides = array<i32>} : memref<2x16x32xf32, #tpu.memory_space<vmem>>, vector<2x16x32xf32>,
    %c0_i32_13 = arith.constant 0 : i32
    %19 = arith.cmpi eq, %arg0, %c0_i32_13 : i32
    %20 = arith.extui %19 : i1 to i32
    %c0_i32_14 = arith.constant 0 : i32
    %21 = arith.cmpi ne, %20, %c0_i32_14 : i32
    scf.if %21 {
      %c0_15 = arith.constant 0 : index
      %c0_16 = arith.constant 0 : index
      %c0_17 = arith.constant 0 : index
      %22 = vector.load %arg9[%c0_15, %c0_16, %c0_17] : memref<2x16x32xf32, #tpu.memory_space<vmem>>, vector<2x16x32xf32>
      %cst_18 = arith.constant 0.000000e+00 : f32
      %23 = vector.broadcast %cst_18 : f32 to vector<2x2x32xf32>
      %24 = tpu.concatenate %22, %23 in 1 : vector<2x16x32xf32>, vector<2x2x32xf32> -> vector<2x18x32xf32>
      %25 = vector.extract_strided_slice %24 {offsets = [0, 0, 0], sizes = [2, 14, 32], strides = [1, 1, 1]} : vector<2x18x32xf32> to vector<2x14x32xf32>
      %26 = vector.extract_strided_slice %24 {offsets = [0, 1, 0], sizes = [2, 14, 32], strides = [1, 1, 1]} : vector<2x18x32xf32> to vector<2x14x32xf32>
      %27 = vector.extract_strided_slice %24 {offsets = [0, 2, 0], sizes = [2, 14, 32], strides = [1, 1, 1]} : vector<2x18x32xf32> to vector<2x14x32xf32>
      %28 = vector.extract_strided_slice %24 {offsets = [0, 3, 0], sizes = [2, 14, 32], strides = [1, 1, 1]} : vector<2x18x32xf32> to vector<2x14x32xf32>
      %29 = vector.extract_strided_slice %24 {offsets = [0, 4, 0], sizes = [2, 14, 32], strides = [1, 1, 1]} : vector<2x18x32xf32> to vector<2x14x32xf32>
      %30 = tpu.concatenate %25, %26, %27, %28, %29 in 2 : vector<2x14x32xf32>, vector<2x14x32xf32>, vector<2x14x32xf32>, vector<2x14x32xf32>, vector<2x14x32xf32> -> vector<2x14x160xf32>
      %31 = arith.truncf %30 : vector<2x14x160xf32> to vector<2x14x160xbf16>
      %c0_19 = arith.constant 0 : index
      %c0_20 = arith.constant 0 : index
      %32 = vector.load %arg3[%c0_19, %c0_20] : memref<160x128xbf16, #tpu.memory_space<vmem>>, vector<160x128xbf16>
      %cst_21 = arith.constant dense<0.000000e+00> : vector<2x14x128xf32>
      %33 = tpu.matmul %31, %32, %cst_21 {dimension_numbers = #tpu.dot_dimension_numbers<[2], [0], [0, 1], [1], [0, 0, 0, 1, 1, 1], [], []>} : vector<2x14x160xbf16>, vector<160x128xbf16>, vector<2x14x128xf32> -> vector<2x14x128xf32>
      %c0_22 = arith.constant 0 : index
      %c0_23 = arith.constant 0 : index
      %34 = vector.load %arg5[%c0_22, %c0_23] : memref<14x128xf32, #tpu.memory_space<vmem>>, vector<14x128xf32>
      %35 = vector.shape_cast %34 : vector<14x128xf32> to vector<1x14x128xf32>
      %36 = vector.broadcast %35 : vector<1x14x128xf32> to vector<2x14x128xf32>
      %37 = arith.addf %33, %36 : vector<2x14x128xf32>
      %cst_24 = arith.constant dense<0xFF800000> : vector<2x128xf32>
      %38 = vector.multi_reduction <maximumf>, %37, %cst_24 [1] : vector<2x14x128xf32> to vector<2x128xf32>
      %c0_25 = arith.constant 0 : index
      %c0_26 = arith.constant 0 : index
      %39 = vector.load %arg4[%c0_25, %c0_26] : memref<1x128xf32, #tpu.memory_space<vmem>>, vector<1x128xf32>
      %40 = vector.broadcast %39 : vector<1x128xf32> to vector<2x128xf32>
      %41 = arith.addf %38, %40 : vector<2x128xf32>
      %cst_27 = arith.constant 0.000000e+00 : f32
      %42 = vector.broadcast %cst_27 : f32 to vector<2x128xf32>
      %43 = arith.maximumf %41, %42 : vector<2x128xf32>
      %c0_28 = arith.constant 0 : index
      %c0_29 = arith.constant 0 : index
      %44 = vector.load %arg6[%c0_28, %c0_29] : memref<128x128xbf16, #tpu.memory_space<vmem>>, vector<128x128xbf16>
      %45 = arith.extf %44 : vector<128x128xbf16> to vector<128x128xf32>
      %cst_30 = arith.constant dense<0.000000e+00> : vector<2x128xf32>
      %46 = tpu.matmul %43, %45, %cst_30 {dimension_numbers = #tpu.dot_dimension_numbers<[1], [0], [0], [1], [0, 0, 1, 1], [], []>} : vector<2x128xf32>, vector<128x128xf32>, vector<2x128xf32> -> vector<2x128xf32>
      %c0_31 = arith.constant 0 : index
      %c0_32 = arith.constant 0 : index
      %47 = vector.load %arg7[%c0_31, %c0_32] : memref<1x128xf32, #tpu.memory_space<vmem>>, vector<1x128xf32>
      %48 = vector.broadcast %47 : vector<1x128xf32> to vector<2x128xf32>
      %49 = arith.addf %46, %48 : vector<2x128xf32>
      %c0_33 = arith.constant 0 : index
      %c0_34 = arith.constant 0 : index
      %50 = vector.load %arg8[%c0_33, %c0_34] : memref<2x128xf32, #tpu.memory_space<vmem>>, vector<2x128xf32>
      tpu.vector_store %arg8[%c0_33, %c0_34], %49 {strides = array<i32>} : memref<2x128xf32, #tpu.memory_space<vmem>>, vector<2x128xf32>,
    } else {
    }
    return
  }
  func.func @transform_0(%arg0: i32) -> (i32, i32, i32) {
    %c0_i32 = arith.constant 0 : i32
    %c0_i32_0 = arith.constant 0 : i32
    %c0_i32_1 = arith.constant 0 : i32
    %c0_i32_2 = arith.constant 0 : i32
    return %c0_i32, %c0_i32_0, %c0_i32_1 : i32, i32, i32
  }
  func.func @transform_1(%arg0: i32) -> (i32, i32) {
    %c0_i32 = arith.constant 0 : i32
    %c0_i32_0 = arith.constant 0 : i32
    return %arg0, %c0_i32 : i32, i32
  }
  func.func @transform_2(%arg0: i32) -> (i32, i32) {
    %c0_i32 = arith.constant 0 : i32
    %c0_i32_0 = arith.constant 0 : i32
    %c0_i32_1 = arith.constant 0 : i32
    return %c0_i32, %c0_i32_0 : i32, i32
  }
  func.func @transform_3(%arg0: i32) -> (i32, i32) {
    %c0_i32 = arith.constant 0 : i32
    %c0_i32_0 = arith.constant 0 : i32
    %c0_i32_1 = arith.constant 0 : i32
    return %c0_i32, %c0_i32_0 : i32, i32
  }
  func.func @transform_4(%arg0: i32) -> (i32, i32) {
    %c0_i32 = arith.constant 0 : i32
    %c0_i32_0 = arith.constant 0 : i32
    %c0_i32_1 = arith.constant 0 : i32
    return %c0_i32, %c0_i32_0 : i32, i32
  }
  func.func @transform_5(%arg0: i32) -> (i32, i32) {
    %c0_i32 = arith.constant 0 : i32
    %c0_i32_0 = arith.constant 0 : i32
    %c0_i32_1 = arith.constant 0 : i32
    return %c0_i32, %c0_i32_0 : i32, i32
  }
  func.func @transform_6(%arg0: i32) -> (i32, i32) {
    %c0_i32 = arith.constant 0 : i32
    %c0_i32_0 = arith.constant 0 : i32
    %c0_i32_1 = arith.constant 0 : i32
    return %c0_i32, %c0_i32_0 : i32, i32
  }
  func.func @transform_7(%arg0: i32) -> (i32, i32) {
    %c0_i32 = arith.constant 0 : i32
    %c0_i32_0 = arith.constant 0 : i32
    %c0_i32_1 = arith.constant 0 : i32
    return %c0_i32, %c0_i32_0 : i32, i32
  }
}

module attributes {stable_mosaic.version = 11 : i64} {
  func.func @kernel(%arg0: i32, %arg1: memref<2x16x1xi32, #tpu.memory_space<vmem>>, %arg2: memref<128x32xbf16, #tpu.memory_space<vmem>>, %arg3: memref<160x128xbf16, #tpu.memory_space<vmem>>, %arg4: memref<1x128xf32, #tpu.memory_space<vmem>>, %arg5: memref<14x128xf32, #tpu.memory_space<vmem>>, %arg6: memref<128x128xbf16, #tpu.memory_space<vmem>>, %arg7: memref<1x128xf32, #tpu.memory_space<vmem>>, %arg8: memref<2x128xf32, #tpu.memory_space<vmem>>, %arg9: memref<2x16x32xf32, #tpu.memory_space<vmem>>) attributes {dimension_semantics = [#tpu.dimension_semantics<arbitrary>], iteration_bounds = array<i64: 1>, scalar_prefetch = 0 : i64, scratch_operands = 1 : i64, tpu.core_type = #tpu.core_type<tc>, window_params = [{pipeline_mode = #tpu.pipeline_mode<synchronous>, transform_indices = @transform_0, window_bounds = array<i64: 2, 16, 1>}, {transform_indices = @transform_1, window_bounds = array<i64: 128, 32>}, {pipeline_mode = #tpu.pipeline_mode<synchronous>, transform_indices = @transform_2, window_bounds = array<i64: 160, 128>}, {pipeline_mode = #tpu.pipeline_mode<synchronous>, transform_indices = @transform_3, window_bounds = array<i64: 1, 128>}, {pipeline_mode = #tpu.pipeline_mode<synchronous>, transform_indices = @transform_4, window_bounds = array<i64: 14, 128>}, {pipeline_mode = #tpu.pipeline_mode<synchronous>, transform_indices = @transform_5, window_bounds = array<i64: 128, 128>}, {pipeline_mode = #tpu.pipeline_mode<synchronous>, transform_indices = @transform_6, window_bounds = array<i64: 1, 128>}, {pipeline_mode = #tpu.pipeline_mode<synchronous>, transform_indices = @transform_7, window_bounds = array<i64: 2, 128>}]} {
    %c0_i32 = arith.constant 0 : i32
    %0 = arith.cmpi eq, %arg0, %c0_i32 : i32
    %1 = arith.extui %0 : i1 to i32
    %c0_i32_0 = arith.constant 0 : i32
    %2 = arith.cmpi ne, %1, %c0_i32_0 : i32
    scf.if %2 {
      %cst_15 = arith.constant 0.000000e+00 : f32
      %22 = vector.broadcast %cst_15 : f32 to vector<2x16x32xf32>
      %c0_16 = arith.constant 0 : index
      %c0_17 = arith.constant 0 : index
      %c0_18 = arith.constant 0 : index
      %23 = vector.load %arg9[%c0_16, %c0_17, %c0_18] : memref<2x16x32xf32, #tpu.memory_space<vmem>>, vector<2x16x32xf32>
      tpu.vector_store %arg9[%c0_16, %c0_17, %c0_18], %22 {strides = array<i32>} : memref<2x16x32xf32, #tpu.memory_space<vmem>>, vector<2x16x32xf32>,
    } else {
    }
    %c0 = arith.constant 0 : index
    %c0_1 = arith.constant 0 : index
    %c0_2 = arith.constant 0 : index
    %3 = vector.load %arg1[%c0, %c0_1, %c0_2] : memref<2x16x1xi32, #tpu.memory_space<vmem>>, vector<2x16x1xi32>
    %c0_3 = arith.constant 0 : index
    %c0_4 = arith.constant 0 : index
    %4 = vector.load %arg2[%c0_3, %c0_4] : memref<128x32xbf16, #tpu.memory_space<vmem>>, vector<128x32xbf16>
    %5 = tpu.iota {dimensions = array<i32: 2>} : vector<2x16x128xi32>
    %c128_i32 = arith.constant 128 : i32
    %6 = arith.muli %arg0, %c128_i32 : i32
    %7 = vector.broadcast %6 : i32 to vector<2x16x128xi32>
    %8 = arith.addi %5, %7 : vector<2x16x128xi32>
    %9 = vector.broadcast %3 : vector<2x16x1xi32> to vector<2x16x128xi32>
    %10 = arith.cmpi eq, %9, %8 : vector<2x16x128xi32>
    %cst = arith.constant 1.000000e+00 : f32
    %cst_5 = arith.constant 0.000000e+00 : f32
    %11 = vector.broadcast %cst : f32 to vector<2x16x128xf32>
    %12 = vector.broadcast %cst_5 : f32 to vector<2x16x128xf32>
    %13 = arith.select %10, %11, %12 : vector<2x16x128xi1>, vector<2x16x128xf32>
    %14 = arith.truncf %13 : vector<2x16x128xf32> to vector<2x16x128xbf16>
    %c0_6 = arith.constant 0 : index
    %c0_7 = arith.constant 0 : index
    %c0_8 = arith.constant 0 : index
    %15 = vector.load %arg9[%c0_6, %c0_7, %c0_8] : memref<2x16x32xf32, #tpu.memory_space<vmem>>, vector<2x16x32xf32>
    %cst_9 = arith.constant dense<0.000000e+00> : vector<2x16x32xf32>
    %16 = tpu.matmul %14, %4, %cst_9 {dimension_numbers = #tpu.dot_dimension_numbers<[2], [0], [0, 1], [1], [0, 0, 0, 1, 1, 1], [], []>} : vector<2x16x128xbf16>, vector<128x32xbf16>, vector<2x16x32xf32> -> vector<2x16x32xf32>
    %17 = arith.addf %15, %16 : vector<2x16x32xf32>
    %c0_10 = arith.constant 0 : index
    %c0_11 = arith.constant 0 : index
    %c0_12 = arith.constant 0 : index
    %18 = vector.load %arg9[%c0_10, %c0_11, %c0_12] : memref<2x16x32xf32, #tpu.memory_space<vmem>>, vector<2x16x32xf32>
    tpu.vector_store %arg9[%c0_10, %c0_11, %c0_12], %17 {strides = array<i32>} : memref<2x16x32xf32, #tpu.memory_space<vmem>>, vector<2x16x32xf32>,
    %c0_i32_13 = arith.constant 0 : i32
    %19 = arith.cmpi eq, %arg0, %c0_i32_13 : i32
    %20 = arith.extui %19 : i1 to i32
    %c0_i32_14 = arith.constant 0 : i32
    %21 = arith.cmpi ne, %20, %c0_i32_14 : i32
    scf.if %21 {
      %c0_15 = arith.constant 0 : index
      %c0_16 = arith.constant 0 : index
      %c0_17 = arith.constant 0 : index
      %22 = vector.load %arg9[%c0_15, %c0_16, %c0_17] : memref<2x16x32xf32, #tpu.memory_space<vmem>>, vector<2x16x32xf32>
      %cst_18 = arith.constant 0.000000e+00 : f32
      %23 = vector.broadcast %cst_18 : f32 to vector<2x2x32xf32>
      %24 = tpu.concatenate %22, %23 in 1 : vector<2x16x32xf32>, vector<2x2x32xf32> -> vector<2x18x32xf32>
      %25 = vector.extract_strided_slice %24 {offsets = [0, 0, 0], sizes = [2, 14, 32], strides = [1, 1, 1]} : vector<2x18x32xf32> to vector<2x14x32xf32>
      %26 = vector.extract_strided_slice %24 {offsets = [0, 1, 0], sizes = [2, 14, 32], strides = [1, 1, 1]} : vector<2x18x32xf32> to vector<2x14x32xf32>
      %27 = vector.extract_strided_slice %24 {offsets = [0, 2, 0], sizes = [2, 14, 32], strides = [1, 1, 1]} : vector<2x18x32xf32> to vector<2x14x32xf32>
      %28 = vector.extract_strided_slice %24 {offsets = [0, 3, 0], sizes = [2, 14, 32], strides = [1, 1, 1]} : vector<2x18x32xf32> to vector<2x14x32xf32>
      %29 = vector.extract_strided_slice %24 {offsets = [0, 4, 0], sizes = [2, 14, 32], strides = [1, 1, 1]} : vector<2x18x32xf32> to vector<2x14x32xf32>
      %30 = tpu.concatenate %25, %26, %27, %28, %29 in 2 : vector<2x14x32xf32>, vector<2x14x32xf32>, vector<2x14x32xf32>, vector<2x14x32xf32>, vector<2x14x32xf32> -> vector<2x14x160xf32>
      %31 = arith.truncf %30 : vector<2x14x160xf32> to vector<2x14x160xbf16>
      %c0_19 = arith.constant 0 : index
      %c0_20 = arith.constant 0 : index
      %32 = vector.load %arg3[%c0_19, %c0_20] : memref<160x128xbf16, #tpu.memory_space<vmem>>, vector<160x128xbf16>
      %cst_21 = arith.constant dense<0.000000e+00> : vector<2x14x128xf32>
      %33 = tpu.matmul %31, %32, %cst_21 {dimension_numbers = #tpu.dot_dimension_numbers<[2], [0], [0, 1], [1], [0, 0, 0, 1, 1, 1], [], []>} : vector<2x14x160xbf16>, vector<160x128xbf16>, vector<2x14x128xf32> -> vector<2x14x128xf32>
      %c0_22 = arith.constant 0 : index
      %c0_23 = arith.constant 0 : index
      %34 = vector.load %arg5[%c0_22, %c0_23] : memref<14x128xf32, #tpu.memory_space<vmem>>, vector<14x128xf32>
      %35 = vector.shape_cast %34 : vector<14x128xf32> to vector<1x14x128xf32>
      %36 = vector.broadcast %35 : vector<1x14x128xf32> to vector<2x14x128xf32>
      %37 = arith.addf %33, %36 : vector<2x14x128xf32>
      %cst_24 = arith.constant dense<0xFF800000> : vector<2x128xf32>
      %38 = vector.multi_reduction <maximumf>, %37, %cst_24 [1] : vector<2x14x128xf32> to vector<2x128xf32>
      %c0_25 = arith.constant 0 : index
      %c0_26 = arith.constant 0 : index
      %39 = vector.load %arg4[%c0_25, %c0_26] : memref<1x128xf32, #tpu.memory_space<vmem>>, vector<1x128xf32>
      %40 = vector.broadcast %39 : vector<1x128xf32> to vector<2x128xf32>
      %41 = arith.addf %38, %40 : vector<2x128xf32>
      %cst_27 = arith.constant 0.000000e+00 : f32
      %42 = vector.broadcast %cst_27 : f32 to vector<2x128xf32>
      %43 = arith.maximumf %41, %42 : vector<2x128xf32>
      %c0_28 = arith.constant 0 : index
      %c0_29 = arith.constant 0 : index
      %44 = vector.load %arg6[%c0_28, %c0_29] : memref<128x128xbf16, #tpu.memory_space<vmem>>, vector<128x128xbf16>
      %45 = arith.extf %44 : vector<128x128xbf16> to vector<128x128xf32>
      %cst_30 = arith.constant dense<0.000000e+00> : vector<2x128xf32>
      %46 = tpu.matmul %43, %45, %cst_30 {dimension_numbers = #tpu.dot_dimension_numbers<[1], [0], [0], [1], [0, 0, 1, 1], [], []>} : vector<2x128xf32>, vector<128x128xf32>, vector<2x128xf32> -> vector<2x128xf32>
      %c0_31 = arith.constant 0 : index
      %c0_32 = arith.constant 0 : index
      %47 = vector.load %arg7[%c0_31, %c0_32] : memref<1x128xf32, #tpu.memory_space<vmem>>, vector<1x128xf32>
      %48 = vector.broadcast %47 : vector<1x128xf32> to vector<2x128xf32>
      %49 = arith.addf %46, %48 : vector<2x128xf32>
      %c0_33 = arith.constant 0 : index
      %c0_34 = arith.constant 0 : index
      %50 = vector.load %arg8[%c0_33, %c0_34] : memref<2x128xf32, #tpu.memory_space<vmem>>, vector<2x128xf32>
      tpu.vector_store %arg8[%c0_33, %c0_34], %49 {strides = array<i32>} : memref<2x128xf32, #tpu.memory_space<vmem>>, vector<2x128xf32>,
    } else {
    }
    return
  }
  func.func @transform_0(%arg0: i32) -> (i32, i32, i32) {
    %c0_i32 = arith.constant 0 : i32
    %c0_i32_0 = arith.constant 0 : i32
    %c0_i32_1 = arith.constant 0 : i32
    %c0_i32_2 = arith.constant 0 : i32
    return %c0_i32, %c0_i32_0, %c0_i32_1 : i32, i32, i32
  }
  func.func @transform_1(%arg0: i32) -> (i32, i32) {
    %c0_i32 = arith.constant 0 : i32
    %c0_i32_0 = arith.constant 0 : i32
    return %arg0, %c0_i32 : i32, i32
  }
  func.func @transform_2(%arg0: i32) -> (i32, i32) {
    %c0_i32 = arith.constant 0 : i32
    %c0_i32_0 = arith.constant 0 : i32
    %c0_i32_1 = arith.constant 0 : i32
    return %c0_i32, %c0_i32_0 : i32, i32
  }
  func.func @transform_3(%arg0: i32) -> (i32, i32) {
    %c0_i32 = arith.constant 0 : i32
    %c0_i32_0 = arith.constant 0 : i32
    %c0_i32_1 = arith.constant 0 : i32
    return %c0_i32, %c0_i32_0 : i32, i32
  }
  func.func @transform_4(%arg0: i32) -> (i32, i32) {
    %c0_i32 = arith.constant 0 : i32
    %c0_i32_0 = arith.constant 0 : i32
    %c0_i32_1 = arith.constant 0 : i32
    return %c0_i32, %c0_i32_0 : i32, i32
  }
  func.func @transform_5(%arg0: i32) -> (i32, i32) {
    %c0_i32 = arith.constant 0 : i32
    %c0_i32_0 = arith.constant 0 : i32
    %c0_i32_1 = arith.constant 0 : i32
    return %c0_i32, %c0_i32_0 : i32, i32
  }
  func.func @transform_6(%arg0: i32) -> (i32, i32) {
    %c0_i32 = arith.constant 0 : i32
    %c0_i32_0 = arith.constant 0 : i32
    %c0_i32_1 = arith.constant 0 : i32
    return %c0_i32, %c0_i32_0 : i32, i32
  }
  func.func @transform_7(%arg0: i32) -> (i32, i32) {
    %c0_i32 = arith.constant 0 : i32
    %c0_i32_0 = arith.constant 0 : i32
    %c0_i32_1 = arith.constant 0 : i32
    return %c0_i32, %c0_i32_0 : i32, i32
  }
}

</mosaic_0001>

<llo_original>
// kernel: tpu_custom_call.1
$region0: #{tpu_custom_call.1}
  #allocation0 [shape = 'u32[]', space=smem, size = 0x4, offset = 0x4, fixed_abs, tag = 'smem constant byte address 0x4 - core index']
  #allocation1 [shape = 'u32[144,128]{1,0:T(1,128)}', space=vmem, size = 0x12000, scoped, tag = 'internal scratch']
  #allocation2 [shape = 'f32[2,16,32]{2,1,0:T(8,128)}', space=vmem, size = 0x4000, scoped, tag = 'scratch operand']
  %s0 = inlined_call_operand.vmem [shape: s32[2,16,1], index: 0, kind: input, shape index: {}]
  %s1 = inlined_call_operand.vmem [shape: bf16[128,32], index: 1, kind: input, shape index: {}]
  %s2 = inlined_call_operand.vmem [shape: bf16[160,128], index: 2, kind: input, shape index: {}]
  %s3 = inlined_call_operand.vmem [shape: f32[1,128], index: 3, kind: input, shape index: {}]
  %s4 = inlined_call_operand.vmem [shape: f32[14,128], index: 4, kind: input, shape index: {}]
  %s5 = inlined_call_operand.hbm [shape: bf16[128,128], index: 5, kind: input, shape index: {}]
  %s6 = inlined_call_operand.vmem [shape: f32[1,128], index: 6, kind: input, shape index: {}]
  %s7 = inlined_call_operand.hbm [shape: f32[2,128], index: 7, kind: output, shape index: {}]
  %s8 = sld [smem:[#allocation0]]
  $region50: #{tpu_custom_call.1} parent=0
    _
  %s10 = ssub.s32 1, %s8
  %s11 = scalar_select 0, %s10, %s8
  $region1: #{tpu_custom_call.1} parent=0
    #allocation3 [shape = 'u8[32768]{0}', space=vmem, size = 0x8000, scoped, tag = 'input window, operand 5, single buffered']
    #allocation4 [shape = 's32[1]{0}', space=sflag, size = 0x4, scoped, tag = 'scoped memory for tpu_custom_call.1']
    #allocation5 [shape = 's32[1]{0}', space=sflag, size = 0x4, scoped, tag = 'scoped memory for tpu_custom_call.1']
    #allocation6 [shape = 'u8[1024]{0}', space=vmem, size = 0x400, scoped, tag = 'output window, operand 0, single buffered']
    %12 = vsyncpa [#allocation4], 0
    %13 = vsyncpa [#allocation5], 0
    // Predicated region
    $region2: #{tpu_custom_call.1} parent=1 // pred_check
      _
    $region3: #{tpu_custom_call.1} parent=1 // pred_check_branch
      %15 = sbr.rel (0) target = $region5
    $region4: #{tpu_custom_call.1} parent=1 // pred_region
      _
    $region5: #{tpu_custom_call.1} parent=1 // pred_fallthru
      _
    // Predicated region
    $region6: #{tpu_custom_call.1} parent=1 // pred_check
      _
    $region7: #{tpu_custom_call.1} parent=1 // pred_check_branch
      %17 = sbr.rel (0) target = $region9
    $region8: #{tpu_custom_call.1} parent=1 // pred_region
      _
    $region9: #{tpu_custom_call.1} parent=1 // pred_fallthru
      _
    // Predicated region
    $region10: #{tpu_custom_call.1} parent=1 // pred_check
      _
    $region11: #{tpu_custom_call.1} parent=1 // pred_check_branch
      %19 = sbr.rel (0) target = $region13
    $region12: #{tpu_custom_call.1} parent=1 // pred_region
      _
    $region13: #{tpu_custom_call.1} parent=1 // pred_fallthru
      _
    // Predicated region
    $region14: #{tpu_custom_call.1} parent=1 // pred_check
      _
    $region15: #{tpu_custom_call.1} parent=1 // pred_check_branch
      %21 = sbr.rel (0) target = $region17
    $region16: #{tpu_custom_call.1} parent=1 // pred_region
      _
    $region17: #{tpu_custom_call.1} parent=1 // pred_fallthru
      _
    // Predicated region
    $region18: #{tpu_custom_call.1} parent=1 // pred_check
      _
    $region19: #{tpu_custom_call.1} parent=1 // pred_check_branch
      %23 = sbr.rel (0) target = $region21
    $region20: #{tpu_custom_call.1} parent=1 // pred_region
      _
    $region21: #{tpu_custom_call.1} parent=1 // pred_fallthru
      _
    // Predicated region
    $region22: #{tpu_custom_call.1} parent=1 // pred_check
      _
    $region23: #{tpu_custom_call.1} parent=1 // pred_check_branch
      %25 = sbr.rel (0) target = $region25
    $region24: #{tpu_custom_call.1} parent=1 // pred_region
      %s27 = ssub.s32 1024, 1024
      %28 = vsyncadd [#allocation4], %s27
      %s29 = sshll.u32 [#allocation3], 4
      %s30 = int_to_ptr.vmem [resolvable:$true] %s29
      %35 = dma.hbm_to_vmem [thread:$0]  %s5, 1024, %s30, [#allocation4], 64, 64, 4
    $region25: #{tpu_custom_call.1} parent=1 // pred_fallthru
      _
    // Predicated region
    $region26: #{tpu_custom_call.1} parent=1 // pred_check
      _
    $region27: #{tpu_custom_call.1} parent=1 // pred_check_branch
      %37 = sbr.rel (0) target = $region29
    $region28: #{tpu_custom_call.1} parent=1 // pred_region
      _
    $region29: #{tpu_custom_call.1} parent=1 // pred_fallthru
      _
    // Predicated region
    $region30: #{tpu_custom_call.1} parent=1 // pred_check
      _
    $region31: #{tpu_custom_call.1} parent=1 // pred_check_branch
      %39 = sbr.rel (0) target = $region33
    $region32: #{tpu_custom_call.1} parent=1 // pred_region
      %40 = dma.done [#allocation4], 1024
    $region33: #{tpu_custom_call.1} parent=1 // pred_fallthru
      _
    %p42 = scmp.eq.s32.totalorder 0, 0
    // Predicated region
    $region34: #{tpu_custom_call.1} parent=1 // pred_check
      %p43 = pneg %p42
    $region35: #{tpu_custom_call.1} parent=1 // pred_check_branch
      %45 = sbr.rel (%p43) target = $region37
    $region36: #{tpu_custom_call.1} parent=1 // pred_region
      %vm46 = vcmask 261120
      %47 = vst.msk [vmem:[#allocation2] sm:$0xff] %vm46, 0.0
      %48 = vst.msk [vmem:[#allocation2 + $0x8] sm:$0xff] %vm46, 0.0
      %49 = vst.msk [vmem:[#allocation2 + $0x10] sm:$0xff] %vm46, 0.0
      %50 = vst.msk [vmem:[#allocation2 + $0x18] sm:$0xff] %vm46, 0.0
    $region37: #{tpu_custom_call.1} parent=1 // pred_fallthru
      _
    %v51 = vld [vmem:[%s0] sm:$0xff]
    %v52 = vld [vmem:[%s0 + $0x8] sm:$0xff]
    %v53 = vld [vmem:[%s0 + $0x10] sm:$0xff]
    %v54 = vld [vmem:[%s0 + $0x18] sm:$0xff]
    %v55 = vld [vmem:[%s1] sm:$0xf]
    %v56 = vld [vmem:[%s1 + $0x4] sm:$0xf]
    %v57 = vld [vmem:[%s1 + $0x8] sm:$0xf]
    %v58 = vld [vmem:[%s1 + $0xc] sm:$0xf]
    %v59 = vld [vmem:[%s1 + $0x10] sm:$0xf]
    %v60 = vld [vmem:[%s1 + $0x14] sm:$0xf]
    %v61 = vld [vmem:[%s1 + $0x18] sm:$0xf]
    %v62 = vld [vmem:[%s1 + $0x1c] sm:$0xf]
    %v63 = vld [vmem:[%s1 + $0x20] sm:$0xf]
    %v64 = vld [vmem:[%s1 + $0x24] sm:$0xf]
    %v65 = vld [vmem:[%s1 + $0x28] sm:$0xf]
    %v66 = vld [vmem:[%s1 + $0x2c] sm:$0xf]
    %v67 = vld [vmem:[%s1 + $0x30] sm:$0xf]
    %v68 = vld [vmem:[%s1 + $0x34] sm:$0xf]
    %v69 = vld [vmem:[%s1 + $0x38] sm:$0xf]
    %v70 = vld [vmem:[%s1 + $0x3c] sm:$0xf]
    %v71 = vlaneseq
    %v72 = vand.u32 %v71, 127
    %s73 = smul.u32 0, 128
    %v74 = vstv %s73
    %v75 = vadd.s32 %v72, %v74
    %76 = vset.pattern.permute.xlu0 0
    %77 = vperm.xlu0 %76, %v51
    %v78 = vpop.permute.xlu0 %77
    %79 = vset.pattern.permute.xlu0 0
    %80 = vperm.xlu0 %79, %v52
    %v81 = vpop.permute.xlu0 %80
    %82 = vset.pattern.permute.xlu0 0
    %83 = vperm.xlu0 %82, %v53
    %v84 = vpop.permute.xlu0 %83
    %85 = vset.pattern.permute.xlu0 0
    %86 = vperm.xlu0 %85, %v54
    %v87 = vpop.permute.xlu0 %86
    %vm88 = vcmp.eq.s32.totalorder %v78, %v75
    %vm89 = vcmp.eq.s32.totalorder %v81, %v75
    %vm90 = vcmp.eq.s32.totalorder %v84, %v75
    %vm91 = vcmp.eq.s32.totalorder %v87, %v75
    %v92 = vsel %vm88, 1.0, 0.0
    %v93 = vsel %vm89, 1.0, 0.0
    %v94 = vsel %vm90, 1.0, 0.0
    %v95 = vsel %vm91, 1.0, 0.0
    %v96 = vpack.c.bf16 %v93, %v92
    %v97 = vpack.c.bf16 %v95, %v94
    %v98 = vld [vmem:[#allocation2] sm:$0xff]
    %v99 = vld [vmem:[#allocation2 + $0x8] sm:$0xff]
    %v100 = vld [vmem:[#allocation2 + $0x10] sm:$0xff]
    %v101 = vld [vmem:[#allocation2 + $0x18] sm:$0xff]
    %v118 = vunpack.c.l.b16 %v55
    %v119 = vunpack.c.l.b16 %v56
    %v120 = vunpack.c.l.b16 %v57
    %v121 = vunpack.c.l.b16 %v58
    %v122 = vunpack.c.l.b16 %v59
    %v123 = vunpack.c.l.b16 %v60
    %v124 = vunpack.c.l.b16 %v61
    %v125 = vunpack.c.l.b16 %v62
    %v126 = vunpack.c.l.b16 %v63
    %v127 = vunpack.c.l.b16 %v64
    %v128 = vunpack.c.l.b16 %v65
    %v129 = vunpack.c.l.b16 %v66
    %v130 = vunpack.c.l.b16 %v67
    %v131 = vunpack.c.l.b16 %v68
    %v132 = vunpack.c.l.b16 %v69
    %v133 = vunpack.c.l.b16 %v70
    %v134 = vpack.c.b16 %v119, %v118
    %v135 = vpack.c.b16 %v121, %v120
    %v136 = vpack.c.b16 %v123, %v122
    %v137 = vpack.c.b16 %v125, %v124
    %v138 = vpack.c.b16 %v127, %v126
    %v139 = vpack.c.b16 %v129, %v128
    %v140 = vpack.c.b16 %v131, %v130
    %v141 = vpack.c.b16 %v133, %v132
    %150 = vmatprep.subr.bf16.mxu0 0
    %151 = vmatpush1.bf16.msra.mxu0 %v134
    %152 = vmatprep.subr.bf16.mxu0 0
    %153 = vmatpush1.bf16.msra.mxu0 %v135
    %154 = vmatprep.subr.bf16.mxu0 0
    %155 = vmatpush1.bf16.msra.mxu0 %v136
    %156 = vmatprep.subr.bf16.mxu0 0
    %157 = vmatpush1.bf16.msra.mxu0 %v137
    %158 = vmatprep.subr.bf16.mxu0 0
    %159 = vmatpush1.bf16.msra.mxu0 %v138
    %160 = vmatprep.subr.bf16.mxu0 0
    %161 = vmatpush1.bf16.msra.mxu0 %v139
    %162 = vmatprep.subr.bf16.mxu0 0
    %163 = vmatpush1.bf16.msra.mxu0 %v140
    %164 = vmatprep.subr.bf16.mxu0 0
    %165 = vmatpush1.bf16.msra.mxu0 %v141
    %166 = vmatprep.subr.bf16.mxu0 0
    %167 = vmatpush1.bf16.msra.mxu0 0
    %168 = vmatprep.subr.bf16.mxu0 0
    %169 = vmatpush1.bf16.msra.mxu0 0
    %170 = vmatprep.subr.bf16.mxu0 0
    %171 = vmatpush1.bf16.msra.mxu0 0
    %172 = vmatprep.subr.bf16.mxu0 0
    %173 = vmatpush1.bf16.msra.mxu0 0
    %174 = vmatprep.subr.bf16.mxu0 0
    %175 = vmatpush1.bf16.msra.mxu0 0
    %176 = vmatprep.subr.bf16.mxu0 0
    %177 = vmatpush1.bf16.msra.mxu0 0
    %178 = vmatprep.subr.bf16.mxu0 0
    %179 = vmatpush1.bf16.msra.mxu0 0
    %180 = vmatprep.subr.bf16.mxu0 0
    %181 = vmatpush1.bf16.msra.mxu0 0
    %182 = vmatprep.mubr.bf16.mxu0 0
    %183 = vmatmul.mubr.bf16.gmra.mrb[0].mxu0 %v96
    %v184 = vpop.f32.mrb[0].mxu0
    %v185 = vadd.f32 0.0, %v184
    %v186 = vpop.f32.mrb[0].mxu0
    %v187 = vpop.f32.mrb[0].mxu0
    %v188 = vadd.f32 0.0, %v187
    %v189 = vpop.f32.mrb[0].mxu0
    %190 = vmatprep.mubr.bf16.mxu0 0
    %191 = vmatmul.mubr.bf16.gmra.mrb[0].mxu0 %v97
    %v192 = vpop.f32.mrb[0].mxu0
    %v193 = vadd.f32 0.0, %v192
    %v194 = vpop.f32.mrb[0].mxu0
    %v195 = vpop.f32.mrb[0].mxu0
    %v196 = vadd.f32 0.0, %v195
    %v197 = vpop.f32.mrb[0].mxu0
    %198 = vdwg.mxu0
    %v199 = vadd.f32 %v98, %v185
    %v200 = vadd.f32 %v99, %v188
    %v201 = vadd.f32 %v100, %v193
    %v202 = vadd.f32 %v101, %v196
    %vm203 = vcmask 261120
    %204 = vst.msk [vmem:[#allocation2] sm:$0xff] %vm203, %v199
    %205 = vst.msk [vmem:[#allocation2 + $0x8] sm:$0xff] %vm203, %v200
    %206 = vst.msk [vmem:[#allocation2 + $0x10] sm:$0xff] %vm203, %v201
    %207 = vst.msk [vmem:[#allocation2 + $0x18] sm:$0xff] %vm203, %v202
    // Predicated region
    $region38: #{tpu_custom_call.1} parent=1 // pred_check
      %p208 = pneg %p42
    $region39: #{tpu_custom_call.1} parent=1 // pred_check_branch
      %210 = sbr.rel (%p208) target = $region41
    $region40: #{tpu_custom_call.1} parent=1 // pred_region
      %v211 = vld [vmem:[#allocation2] sm:$0xff]
      %v212 = vld [vmem:[#allocation2 + $0x8] sm:$0xff]
      %v213 = vld [vmem:[#allocation2 + $0x10] sm:$0xff]
      %v214 = vld [vmem:[#allocation2 + $0x18] sm:$0xff]
      %vm219 = vcmask 1046528
      %v220 = vrot.slane %v211, 1
      %v221 = vrot.slane %v212, 1
      %v222 = vsel %vm219, %v220, %v221
      %v223 = vrot.slane %v213, 1
      %v224 = vrot.slane %v214, 1
      %v225 = vsel %vm219, %v223, %v224
      %226 = vrot.lane.b32.xlu0 %v222, 32
      %v227 = vpop.permute.xlu0 %226
      %228 = vrot.lane.b32.xlu0 %v221, 32
      %v229 = vpop.permute.xlu0 %228
      %230 = vrot.lane.b32.xlu0 %v225, 32
      %v231 = vpop.permute.xlu0 %230
      %232 = vrot.lane.b32.xlu0 %v224, 32
      %v233 = vpop.permute.xlu0 %232
      %vm238 = vcmask 1045504
      %v239 = vrot.slane %v211, 2
      %v240 = vrot.slane %v212, 2
      %v241 = vsel %vm238, %v239, %v240
      %v242 = vrot.slane %v213, 2
      %v243 = vrot.slane %v214, 2
      %v244 = vsel %vm238, %v242, %v243
      %245 = vrot.lane.b32.xlu0 %v241, 64
      %v246 = vpop.permute.xlu0 %245
      %247 = vrot.lane.b32.xlu0 %v240, 64
      %v248 = vpop.permute.xlu0 %247
      %249 = vrot.lane.b32.xlu0 %v244, 64
      %v250 = vpop.permute.xlu0 %249
      %251 = vrot.lane.b32.xlu0 %v243, 64
      %v252 = vpop.permute.xlu0 %251
      %vm258 = vcmask 1044480
      %v259 = vrot.slane %v211, 3
      %v260 = vrot.slane %v212, 3
      %v261 = vsel %vm258, %v259, %v260
      %v262 = vrot.slane 0.0, 3
      %v263 = vsel %vm258, %v260, %v262
      %v264 = vrot.slane %v213, 3
      %v265 = vrot.slane %v214, 3
      %v266 = vsel %vm258, %v264, %v265
      %v267 = vsel %vm258, %v265, %v262
      %268 = vrot.lane.b32.xlu0 %v261, 96
      %v269 = vpop.permute.xlu0 %268
      %270 = vrot.lane.b32.xlu0 %v263, 96
      %v271 = vpop.permute.xlu0 %270
      %272 = vrot.lane.b32.xlu0 %v266, 96
      %v273 = vpop.permute.xlu0 %272
      %274 = vrot.lane.b32.xlu0 %v267, 96
      %v275 = vpop.permute.xlu0 %274
      %vm280 = vcmask 1043456
      %v281 = vrot.slane %v211, 4
      %v282 = vrot.slane %v212, 4
      %v283 = vsel %vm280, %v281, %v282
      %v284 = vrot.slane 0.0, 4
      %v285 = vsel %vm280, %v282, %v284
      %v286 = vrot.slane %v213, 4
      %v287 = vrot.slane %v214, 4
      %v288 = vsel %vm280, %v286, %v287
      %v289 = vsel %vm280, %v287, %v284
      %v294 = vsel %vm203, %v211, %v227
      %v295 = vsel %vm203, %v212, %v229
      %v296 = vsel %vm203, %v213, %v231
      %v297 = vsel %vm203, %v214, %v233
      %vm298 = vcmask 523264
      %v299 = vsel %vm298, %v294, %v246
      %v300 = vsel %vm298, %v295, %v248
      %v301 = vsel %vm298, %v296, %v250
      %v302 = vsel %vm298, %v297, %v252
      %vm303 = vcmask 785408
      %v304 = vsel %vm303, %v299, %v269
      %v305 = vsel %vm303, %v300, %v271
      %v306 = vsel %vm303, %v301, %v273
      %v307 = vsel %vm303, %v302, %v275
      %v308 = vpack.c.bf16 %v305, %v304
      %v309 = vpack.c.bf16 %v285, %v283
      %v310 = vpack.c.bf16 %v307, %v306
      %v311 = vpack.c.bf16 %v289, %v288
      %v312 = vld [vmem:[%s2] sm:$0xf]
      %v313 = vld [vmem:[%s2 + $0x4] sm:$0xf]
      %v314 = vld [vmem:[%s2 + $0x8] sm:$0xf]
      %v315 = vld [vmem:[%s2 + $0xc] sm:$0xf]
      %v316 = vld [vmem:[%s2 + $0x10] sm:$0xf]
      %v317 = vld [vmem:[%s2 + $0x14] sm:$0xf]
      %v318 = vld [vmem:[%s2 + $0x18] sm:$0xf]
      %v319 = vld [vmem:[%s2 + $0x1c] sm:$0xf]
      %v320 = vld [vmem:[%s2 + $0x20] sm:$0xf]
      %v321 = vld [vmem:[%s2 + $0x24] sm:$0xf]
      %v322 = vld [vmem:[%s2 + $0x28] sm:$0xf]
      %v323 = vld [vmem:[%s2 + $0x2c] sm:$0xf]
      %v324 = vld [vmem:[%s2 + $0x30] sm:$0xf]
      %v325 = vld [vmem:[%s2 + $0x34] sm:$0xf]
      %v326 = vld [vmem:[%s2 + $0x38] sm:$0xf]
      %v327 = vld [vmem:[%s2 + $0x3c] sm:$0xf]
      %v328 = vld [vmem:[%s2 + $0x40] sm:$0xf]
      %v329 = vld [vmem:[%s2 + $0x44] sm:$0xf]
      %v330 = vld [vmem:[%s2 + $0x48] sm:$0xf]
      %v331 = vld [vmem:[%s2 + $0x4c] sm:$0xf]
      %v332 = vld [vmem:[%s4] sm:$0xff]
      %v333 = vld [vmem:[%s4 + $0x8] sm:$0x3f]
      %v338 = vcombine.low %v308, %v309
      %v339 = vcombine.high %v308, %v309
      %v341 = vunpack.c.l.s4 1966171168
      %v342 = vunpack.c.0.s8 %v341
      %v343 = vlaneseq
      %v344 = vshrl.u32 %v343, 7
      %v345 = vsub.s32 %v342, %v344
      %v346 = vrot.slane %v338, %v345
      %v348 = vunpack.c.l.s4 1966171168
      %v349 = vunpack.c.0.s8 %v348
      %v350 = vlaneseq
      %v351 = vshrl.u32 %v350, 7
      %v352 = vsub.s32 %v349, %v351
      %v353 = vrot.slane %v339, %v352
      %v354 = vcombine.high %v346, %v346
      %v355 = vcombine.high %v353, %v353
      %v357 = vunpack.c.l.s4 1966171168
      %v358 = vunpack.c.0.s8 %v357
      %v359 = vlaneseq
      %v360 = vshrl.u32 %v359, 7
      %v361 = vsub.s32 %v358, %v360
      %v362 = vrot.slane %v346, %v361
      %v364 = vunpack.c.l.s4 1966171168
      %v365 = vunpack.c.0.s8 %v364
      %v366 = vlaneseq
      %v367 = vshrl.u32 %v366, 7
      %v368 = vsub.s32 %v365, %v367
      %v369 = vrot.slane %v353, %v368
      %v371 = vunpack.c.l.s4 1966171168
      %v372 = vunpack.c.0.s8 %v371
      %v373 = vlaneseq
      %v374 = vshrl.u32 %v373, 7
      %v375 = vsub.s32 %v372, %v374
      %v376 = vrot.slane %v354, %v375
      %v378 = vunpack.c.l.s4 1966171168
      %v379 = vunpack.c.0.s8 %v378
      %v380 = vlaneseq
      %v381 = vshrl.u32 %v380, 7
      %v382 = vsub.s32 %v379, %v381
      %v383 = vrot.slane %v355, %v382
      %v384 = vcombine.high %v362, %v362
      %v385 = vcombine.high %v369, %v369
      %v386 = vcombine.high %v376, %v376
      %v387 = vcombine.low %v310, %v311
      %v388 = vcombine.high %v310, %v311
      %v390 = vunpack.c.l.s4 1966171168
      %v391 = vunpack.c.0.s8 %v390
      %v392 = vlaneseq
      %v393 = vshrl.u32 %v392, 7
      %v394 = vsub.s32 %v391, %v393
      %v395 = vrot.slane %v387, %v394
      %v397 = vunpack.c.l.s4 1966171168
      %v398 = vunpack.c.0.s8 %v397
      %v399 = vlaneseq
      %v400 = vshrl.u32 %v399, 7
      %v401 = vsub.s32 %v398, %v400
      %v402 = vrot.slane %v388, %v401
      %v403 = vcombine.high %v395, %v395
      %v404 = vcombine.high %v402, %v402
      %v406 = vunpack.c.l.s4 1966171168
      %v407 = vunpack.c.0.s8 %v406
      %v408 = vlaneseq
      %v409 = vshrl.u32 %v408, 7
      %v410 = vsub.s32 %v407, %v409
      %v411 = vrot.slane %v395, %v410
      %v413 = vunpack.c.l.s4 1966171168
      %v414 = vunpack.c.0.s8 %v413
      %v415 = vlaneseq
      %v416 = vshrl.u32 %v415, 7
      %v417 = vsub.s32 %v414, %v416
      %v418 = vrot.slane %v402, %v417
      %v420 = vunpack.c.l.s4 1966171168
      %v421 = vunpack.c.0.s8 %v420
      %v422 = vlaneseq
      %v423 = vshrl.u32 %v422, 7
      %v424 = vsub.s32 %v421, %v423
      %v425 = vrot.slane %v403, %v424
      %v427 = vunpack.c.l.s4 1966171168
      %v428 = vunpack.c.0.s8 %v427
      %v429 = vlaneseq
      %v430 = vshrl.u32 %v429, 7
      %v431 = vsub.s32 %v428, %v430
      %v432 = vrot.slane %v404, %v431
      %v433 = vcombine.high %v411, %v411
      %v434 = vcombine.high %v418, %v418
      %v435 = vcombine.high %v425, %v425
      %v438 = vcombine.high %v332, %v332
      %v440 = vunpack.c.l.s4 1983009808
      %v441 = vunpack.c.0.s8 %v440
      %v442 = vlaneseq
      %v443 = vshrl.u32 %v442, 7
      %v444 = vsub.s32 %v441, %v443
      %v445 = vrot.slane %v332, %v444
      %v447 = vunpack.c.l.s4 1983009808
      %v448 = vunpack.c.0.s8 %v447
      %v449 = vlaneseq
      %v450 = vshrl.u32 %v449, 7
      %v451 = vsub.s32 %v448, %v450
      %v452 = vrot.slane %v438, %v451
      %v453 = vcombine.high %v445, %v445
      %v454 = vcombine.high %v452, %v452
      %v455 = vcombine.high %v333, %v333
      %v457 = vunpack.c.l.s4 1983009808
      %v458 = vunpack.c.0.s8 %v457
      %v459 = vlaneseq
      %v460 = vshrl.u32 %v459, 7
      %v461 = vsub.s32 %v458, %v460
      %v462 = vrot.slane %v333, %v461
      %v464 = vunpack.c.l.s4 1983009808
      %v465 = vunpack.c.0.s8 %v464
      %v466 = vlaneseq
      %v467 = vshrl.u32 %v466, 7
      %v468 = vsub.s32 %v465, %v467
      %v469 = vrot.slane %v455, %v468
      %v470 = vcombine.high %v462, %v462
      %v471 = vcombine.low %v362, %v376
      %v472 = vcombine.low %v384, %v386
      %v473 = vcombine.low %v369, %v383
      %v474 = vcombine.low %v385, %v411
      %v476 = vunpack.c.l.s4 1966171168
      %v477 = vunpack.c.0.s8 %v476
      %v478 = vlaneseq
      %v479 = vshrl.u32 %v478, 7
      %v480 = vsub.s32 %v477, %v479
      %v481 = vrot.slane %v471, %v480
      %v483 = vunpack.c.l.s4 1966171168
      %v484 = vunpack.c.0.s8 %v483
      %v485 = vlaneseq
      %v486 = vshrl.u32 %v485, 7
      %v487 = vsub.s32 %v484, %v486
      %v488 = vrot.slane %v472, %v487
      %v490 = vunpack.c.l.s4 1966171168
      %v491 = vunpack.c.0.s8 %v490
      %v492 = vlaneseq
      %v493 = vshrl.u32 %v492, 7
      %v494 = vsub.s32 %v491, %v493
      %v495 = vrot.slane %v473, %v494
      %v497 = vunpack.c.l.s4 1966171168
      %v498 = vunpack.c.0.s8 %v497
      %v499 = vlaneseq
      %v500 = vshrl.u32 %v499, 7
      %v501 = vsub.s32 %v498, %v500
      %v502 = vrot.slane %v474, %v501
      %v503 = vcombine.low %v481, %v488
      %v504 = vcombine.high %v481, %v488
      %v505 = vcombine.low %v495, %v502
      %v506 = vcombine.high %v495, %v502
      %v508 = vunpack.c.l.s4 1966171168
      %v509 = vunpack.c.0.s8 %v508
      %v510 = vlaneseq
      %v511 = vshrl.u32 %v510, 7
      %v512 = vsub.s32 %v509, %v511
      %v513 = vrot.slane %v503, %v512
      %v515 = vunpack.c.l.s4 1966171168
      %v516 = vunpack.c.0.s8 %v515
      %v517 = vlaneseq
      %v518 = vshrl.u32 %v517, 7
      %v519 = vsub.s32 %v516, %v518
      %v520 = vrot.slane %v504, %v519
      %v522 = vunpack.c.l.s4 1966171168
      %v523 = vunpack.c.0.s8 %v522
      %v524 = vlaneseq
      %v525 = vshrl.u32 %v524, 7
      %v526 = vsub.s32 %v523, %v525
      %v527 = vrot.slane %v505, %v526
      %v529 = vunpack.c.l.s4 1966171168
      %v530 = vunpack.c.0.s8 %v529
      %v531 = vlaneseq
      %v532 = vshrl.u32 %v531, 7
      %v533 = vsub.s32 %v530, %v532
      %v534 = vrot.slane %v506, %v533
      %v535 = vcombine.low %v513, %v527
      %v536 = vcombine.low %v520, %v534
      %v537 = vcombine.low %v425, %v433
      %v538 = vcombine.low %v435, %v418
      %v539 = vcombine.low %v432, %v434
      %v541 = vunpack.c.l.s4 1966171168
      %v542 = vunpack.c.0.s8 %v541
      %v543 = vlaneseq
      %v544 = vshrl.u32 %v543, 7
      %v545 = vsub.s32 %v542, %v544
      %v546 = vrot.slane %v537, %v545
      %v548 = vunpack.c.l.s4 1966171168
      %v549 = vunpack.c.0.s8 %v548
      %v550 = vlaneseq
      %v551 = vshrl.u32 %v550, 7
      %v552 = vsub.s32 %v549, %v551
      %v553 = vrot.slane %v538, %v552
      %v555 = vunpack.c.l.s4 1966171168
      %v556 = vunpack.c.0.s8 %v555
      %v557 = vlaneseq
      %v558 = vshrl.u32 %v557, 7
      %v559 = vsub.s32 %v556, %v558
      %v560 = vrot.slane %v539, %v559
      %v561 = vcombine.low %v546, %v553
      %v562 = vcombine.high %v546, %v553
      %v563 = vcombine.high %v560, %v560
      %v565 = vunpack.c.l.s4 1966171168
      %v566 = vunpack.c.0.s8 %v565
      %v567 = vlaneseq
      %v568 = vshrl.u32 %v567, 7
      %v569 = vsub.s32 %v566, %v568
      %v570 = vrot.slane %v561, %v569
      %v572 = vunpack.c.l.s4 1966171168
      %v573 = vunpack.c.0.s8 %v572
      %v574 = vlaneseq
      %v575 = vshrl.u32 %v574, 7
      %v576 = vsub.s32 %v573, %v575
      %v577 = vrot.slane %v562, %v576
      %v579 = vunpack.c.l.s4 1966171168
      %v580 = vunpack.c.0.s8 %v579
      %v581 = vlaneseq
      %v582 = vshrl.u32 %v581, 7
      %v583 = vsub.s32 %v580, %v582
      %v584 = vrot.slane %v560, %v583
      %v586 = vunpack.c.l.s4 1966171168
      %v587 = vunpack.c.0.s8 %v586
      %v588 = vlaneseq
      %v589 = vshrl.u32 %v588, 7
      %v590 = vsub.s32 %v587, %v589
      %v591 = vrot.slane %v563, %v590
      %v592 = vcombine.low %v570, %v584
      %v593 = vcombine.low %v577, %v591
      %v616 = vunpack.c.l.b16 %v312
      %v617 = vunpack.c.l.b16 %v313
      %v618 = vunpack.c.l.b16 %v314
      %v619 = vunpack.c.l.b16 %v315
      %v620 = vunpack.c.l.b16 %v316
      %v621 = vunpack.c.l.b16 %v317
      %v622 = vunpack.c.l.b16 %v318
      %v623 = vunpack.c.l.b16 %v319
      %v624 = vunpack.c.l.b16 %v320
      %v625 = vunpack.c.l.b16 %v321
      %v626 = vunpack.c.l.b16 %v322
      %v627 = vunpack.c.l.b16 %v323
      %v628 = vunpack.c.l.b16 %v324
      %v629 = vunpack.c.l.b16 %v325
      %v630 = vunpack.c.l.b16 %v326
      %v631 = vunpack.c.l.b16 %v327
      %v632 = vunpack.c.l.b16 %v328
      %v633 = vunpack.c.l.b16 %v329
      %v634 = vunpack.c.l.b16 %v330
      %v635 = vunpack.c.l.b16 %v331
      %v636 = vpack.c.b16 %v617, %v616
      %v637 = vpack.c.b16 %v619, %v618
      %v638 = vpack.c.b16 %v621, %v620
      %v639 = vpack.c.b16 %v623, %v622
      %v640 = vpack.c.b16 %v625, %v624
      %v641 = vpack.c.b16 %v627, %v626
      %v642 = vpack.c.b16 %v629, %v628
      %v643 = vpack.c.b16 %v631, %v630
      %v644 = vpack.c.b16 %v633, %v632
      %v645 = vpack.c.b16 %v635, %v634
      %v656 = vcombine.low %v445, %v453
      %v657 = vcombine.low %v452, %v454
      %v659 = vunpack.c.l.s4 1983009808
      %v660 = vunpack.c.0.s8 %v659
      %v661 = vlaneseq
      %v662 = vshrl.u32 %v661, 7
      %v663 = vsub.s32 %v660, %v662
      %v664 = vrot.slane %v656, %v663
      %v666 = vunpack.c.l.s4 1983009808
      %v667 = vunpack.c.0.s8 %v666
      %v668 = vlaneseq
      %v669 = vshrl.u32 %v668, 7
      %v670 = vsub.s32 %v667, %v669
      %v671 = vrot.slane %v657, %v670
      %v672 = vcombine.low %v664, %v671
      %v673 = vcombine.low %v462, %v470
      %v674 = vcombine.low %v469, %v445
      %v676 = vunpack.c.l.s4 1983009808
      %v677 = vunpack.c.0.s8 %v676
      %v678 = vlaneseq
      %v679 = vshrl.u32 %v678, 7
      %v680 = vsub.s32 %v677, %v679
      %v681 = vrot.slane %v673, %v680
      %v683 = vunpack.c.l.s4 1983009808
      %v684 = vunpack.c.0.s8 %v683
      %v685 = vlaneseq
      %v686 = vshrl.u32 %v685, 7
      %v687 = vsub.s32 %v684, %v686
      %v688 = vrot.slane %v674, %v687
      %v689 = vcombine.low %v681, %v688
      %v690 = vcombine.low %v453, %v452
      %v691 = vcombine.low %v454, %v462
      %v693 = vunpack.c.l.s4 1983009808
      %v694 = vunpack.c.0.s8 %v693
      %v695 = vlaneseq
      %v696 = vshrl.u32 %v695, 7
      %v697 = vsub.s32 %v694, %v696
      %v698 = vrot.slane %v690, %v697
      %v700 = vunpack.c.l.s4 1983009808
      %v701 = vunpack.c.0.s8 %v700
      %v702 = vlaneseq
      %v703 = vshrl.u32 %v702, 7
      %v704 = vsub.s32 %v701, %v703
      %v705 = vrot.slane %v691, %v704
      %v706 = vcombine.low %v698, %v705
      %v707 = vcombine.low %v470, %v469
      %v709 = vunpack.c.l.s4 1983009808
      %v710 = vunpack.c.0.s8 %v709
      %v711 = vlaneseq
      %v712 = vshrl.u32 %v711, 7
      %v713 = vsub.s32 %v710, %v712
      %v714 = vrot.slane %v707, %v713
      %v720 = vsel %vm203, %v536, 0
      %v723 = vsel %vm203, %v593, 0
      %725 = vmatprep.subr.bf16.mxu0 0
      %726 = vmatpush1.bf16.msra.mxu0 %v636
      %727 = vmatprep.subr.bf16.mxu0 0
      %728 = vmatpush1.bf16.msra.mxu0 %v637
      %729 = vmatprep.subr.bf16.mxu0 0
      %730 = vmatpush1.bf16.msra.mxu0 %v638
      %731 = vmatprep.subr.bf16.mxu0 0
      %732 = vmatpush1.bf16.msra.mxu0 %v639
      %733 = vmatprep.subr.bf16.mxu0 0
      %734 = vmatpush1.bf16.msra.mxu0 %v640
      %735 = vmatprep.subr.bf16.mxu0 0
      %736 = vmatpush1.bf16.msra.mxu0 %v641
      %737 = vmatprep.subr.bf16.mxu0 0
      %738 = vmatpush1.bf16.msra.mxu0 %v642
      %739 = vmatprep.subr.bf16.mxu0 0
      %740 = vmatpush1.bf16.msra.mxu0 %v643
      %741 = vmatprep.subr.bf16.mxu0 0
      %742 = vmatpush1.bf16.msra.mxu0 %v644
      %743 = vmatprep.subr.bf16.mxu0 0
      %744 = vmatpush1.bf16.msra.mxu0 %v645
      %745 = vmatprep.subr.bf16.mxu0 0
      %746 = vmatpush1.bf16.msra.mxu0 0
      %747 = vmatprep.subr.bf16.mxu0 0
      %748 = vmatpush1.bf16.msra.mxu0 0
      %749 = vmatprep.subr.bf16.mxu0 0
      %750 = vmatpush1.bf16.msra.mxu0 0
      %751 = vmatprep.subr.bf16.mxu0 0
      %752 = vmatpush1.bf16.msra.mxu0 0
      %753 = vmatprep.subr.bf16.mxu0 0
      %754 = vmatpush1.bf16.msra.mxu0 0
      %755 = vmatprep.subr.bf16.mxu0 0
      %756 = vmatpush1.bf16.msra.mxu0 0
      %757 = vmatprep.mubr.bf16.mxu0 %v720
      %758 = vmatmul.mubr.bf16.gmra.mrb[0].mxu0 %v535
      %v759 = vpop.f32.mrb[0].mxu0
      %v760 = vadd.f32 %v672, %v759
      %v761 = vpop.f32.mrb[0].mxu0
      %v762 = vpop.f32.mrb[0].mxu0
      %v763 = vadd.f32 %v689, %v762
      %v764 = vpop.f32.mrb[0].mxu0
      %765 = vmatprep.mubr.bf16.mxu0 %v723
      %766 = vmatmul.mubr.bf16.gmra.mrb[0].mxu0 %v592
      %v767 = vpop.f32.mrb[0].mxu0
      %v768 = vadd.f32 %v706, %v767
      %v769 = vpop.f32.mrb[0].mxu0
      %v770 = vpop.f32.mrb[0].mxu0
      %v771 = vadd.f32 %v714, %v770
      %v772 = vpop.f32.mrb[0].mxu0
      %773 = vdwg.mxu0
      %v778 = vcombine.high %v760, %v760
      %v780 = vunpack.c.l.s4 1983009808
      %v781 = vunpack.c.0.s8 %v780
      %v782 = vlaneseq
      %v783 = vshrl.u32 %v782, 7
      %v784 = vsub.s32 %v781, %v783
      %v785 = vrot.slane %v760, %v784
      %v787 = vunpack.c.l.s4 1983009808
      %v788 = vunpack.c.0.s8 %v787
      %v789 = vlaneseq
      %v790 = vshrl.u32 %v789, 7
      %v791 = vsub.s32 %v788, %v790
      %v792 = vrot.slane %v778, %v791
      %v793 = vcombine.high %v785, %v785
      %v794 = vcombine.high %v792, %v792
      %v795 = vcombine.high %v763, %v763
      %v797 = vunpack.c.l.s4 1983009808
      %v798 = vunpack.c.0.s8 %v797
      %v799 = vlaneseq
      %v800 = vshrl.u32 %v799, 7
      %v801 = vsub.s32 %v798, %v800
      %v802 = vrot.slane %v763, %v801
      %v804 = vunpack.c.l.s4 1983009808
      %v805 = vunpack.c.0.s8 %v804
      %v806 = vlaneseq
      %v807 = vshrl.u32 %v806, 7
      %v808 = vsub.s32 %v805, %v807
      %v809 = vrot.slane %v795, %v808
      %v810 = vcombine.high %v802, %v802
      %v811 = vcombine.high %v809, %v809
      %v812 = vcombine.high %v768, %v768
      %v814 = vunpack.c.l.s4 1983009808
      %v815 = vunpack.c.0.s8 %v814
      %v816 = vlaneseq
      %v817 = vshrl.u32 %v816, 7
      %v818 = vsub.s32 %v815, %v817
      %v819 = vrot.slane %v768, %v818
      %v821 = vunpack.c.l.s4 1983009808
      %v822 = vunpack.c.0.s8 %v821
      %v823 = vlaneseq
      %v824 = vshrl.u32 %v823, 7
      %v825 = vsub.s32 %v822, %v824
      %v826 = vrot.slane %v812, %v825
      %v827 = vcombine.high %v819, %v819
      %v828 = vcombine.high %v826, %v826
      %v830 = vunpack.c.l.s4 1983009808
      %v831 = vunpack.c.0.s8 %v830
      %v832 = vlaneseq
      %v833 = vshrl.u32 %v832, 7
      %v834 = vsub.s32 %v831, %v833
      %v835 = vrot.slane %v771, %v834
      %v836 = vcombine.high %v835, %v835
      %v837 = vcombine.low %v785, %v793
      %v838 = vcombine.low %v792, %v794
      %v840 = vunpack.c.l.s4 1983009808
      %v841 = vunpack.c.0.s8 %v840
      %v842 = vlaneseq
      %v843 = vshrl.u32 %v842, 7
      %v844 = vsub.s32 %v841, %v843
      %v845 = vrot.slane %v837, %v844
      %v847 = vunpack.c.l.s4 1983009808
      %v848 = vunpack.c.0.s8 %v847
      %v849 = vlaneseq
      %v850 = vshrl.u32 %v849, 7
      %v851 = vsub.s32 %v848, %v850
      %v852 = vrot.slane %v838, %v851
      %v853 = vcombine.low %v845, %v852
      %v854 = vcombine.low %v802, %v810
      %v856 = vunpack.c.l.s4 1983009808
      %v857 = vunpack.c.0.s8 %v856
      %v858 = vlaneseq
      %v859 = vshrl.u32 %v858, 7
      %v860 = vsub.s32 %v857, %v859
      %v861 = vrot.slane %v854, %v860
      %v863 = vunpack.c.l.s4 1983009808
      %v864 = vunpack.c.0.s8 %v863
      %v865 = vlaneseq
      %v866 = vshrl.u32 %v865, 7
      %v867 = vsub.s32 %v864, %v866
      %v868 = vrot.slane %v809, %v867
      %v869 = vcombine.low %v861, %v868
      %v870 = vcombine.low %v811, %v819
      %v871 = vcombine.low %v827, %v826
      %v873 = vunpack.c.l.s4 1983009808
      %v874 = vunpack.c.0.s8 %v873
      %v875 = vlaneseq
      %v876 = vshrl.u32 %v875, 7
      %v877 = vsub.s32 %v874, %v876
      %v878 = vrot.slane %v870, %v877
      %v880 = vunpack.c.l.s4 1983009808
      %v881 = vunpack.c.0.s8 %v880
      %v882 = vlaneseq
      %v883 = vshrl.u32 %v882, 7
      %v884 = vsub.s32 %v881, %v883
      %v885 = vrot.slane %v871, %v884
      %v886 = vcombine.low %v878, %v885
      %v887 = vcombine.low %v828, %v835
      %v889 = vunpack.c.l.s4 1983009808
      %v890 = vunpack.c.0.s8 %v889
      %v891 = vlaneseq
      %v892 = vshrl.u32 %v891, 7
      %v893 = vsub.s32 %v890, %v892
      %v894 = vrot.slane %v887, %v893
      %v896 = vunpack.c.l.s4 1983009808
      %v897 = vunpack.c.0.s8 %v896
      %v898 = vlaneseq
      %v899 = vshrl.u32 %v898, 7
      %v900 = vsub.s32 %v897, %v899
      %v901 = vrot.slane %v836, %v900
      %v902 = vcombine.low %v894, %v901
      %v907 = vsel %vm238, %v869, -inf
      %v908 = vmax.f32 %v853, %v907
      %v909 = vrot.slane %v908, 4
      %v910 = vmax.f32 %v908, %v909
      %v911 = vrot.slane %v910, 2
      %v912 = vmax.f32 %v910, %v911
      %v913 = vrot.slane %v912, 1
      %v914 = vmax.f32 %v912, %v913
      %v915 = vsel %vm238, %v902, -inf
      %v916 = vmax.f32 %v886, %v915
      %v917 = vrot.slane %v916, 4
      %v918 = vmax.f32 %v916, %v917
      %v919 = vrot.slane %v918, 2
      %v920 = vmax.f32 %v918, %v919
      %v921 = vrot.slane %v920, 1
      %v922 = vmax.f32 %v920, %v921
      %v923 = vld [vmem:[%s3] sm:$0x1]
      %v925 = vlaneseq
      %v926 = vshrl.u32 %v925, 7
      %v927 = vsub.s32 0, %v926
      %v928 = vrot.slane %v923, %v927
      %v930 = vadd.f32 %v914, %v928
      %v931 = vadd.f32 %v922, %v928
      %v932 = vmax.f32 %v930, 0.0
      %v933 = vmax.f32 %v931, 0.0
      %v934 = vld [vmem:[#allocation3] sm:$0xf]
      %v935 = vld [vmem:[#allocation3 + $0x4] sm:$0xf]
      %v936 = vld [vmem:[#allocation3 + $0x8] sm:$0xf]
      %v937 = vld [vmem:[#allocation3 + $0xc] sm:$0xf]
      %v938 = vld [vmem:[#allocation3 + $0x10] sm:$0xf]
      %v939 = vld [vmem:[#allocation3 + $0x14] sm:$0xf]
      %v940 = vld [vmem:[#allocation3 + $0x18] sm:$0xf]
      %v941 = vld [vmem:[#allocation3 + $0x1c] sm:$0xf]
      %v942 = vld [vmem:[#allocation3 + $0x20] sm:$0xf]
      %v943 = vld [vmem:[#allocation3 + $0x24] sm:$0xf]
      %v944 = vld [vmem:[#allocation3 + $0x28] sm:$0xf]
      %v945 = vld [vmem:[#allocation3 + $0x2c] sm:$0xf]
      %v946 = vld [vmem:[#allocation3 + $0x30] sm:$0xf]
      %v947 = vld [vmem:[#allocation3 + $0x34] sm:$0xf]
      %v948 = vld [vmem:[#allocation3 + $0x38] sm:$0xf]
      %v949 = vld [vmem:[#allocation3 + $0x3c] sm:$0xf]
      %v950 = vunpack.c.l.bf16 %v934
      %v951 = vunpack.c.l.bf16 %v935
      %v952 = vunpack.c.l.bf16 %v936
      %v953 = vunpack.c.l.bf16 %v937
      %v954 = vunpack.c.l.bf16 %v938
      %v955 = vunpack.c.l.bf16 %v939
      %v956 = vunpack.c.l.bf16 %v940
      %v957 = vunpack.c.l.bf16 %v941
      %v958 = vunpack.c.l.bf16 %v942
      %v959 = vunpack.c.l.bf16 %v943
      %v960 = vunpack.c.l.bf16 %v944
      %v961 = vunpack.c.l.bf16 %v945
      %v962 = vunpack.c.l.bf16 %v946
      %v963 = vunpack.c.l.bf16 %v947
      %v964 = vunpack.c.l.bf16 %v948
      %v965 = vunpack.c.l.bf16 %v949
      %v966 = vld [vmem:[%s6] sm:$0x1]
      %v968 = vlaneseq
      %v969 = vshrl.u32 %v968, 7
      %v970 = vsub.s32 0, %v969
      %v971 = vrot.slane %v966, %v970
      %v975 = vrot.slane %v933, 7
      %vm976 = vcmask 1041409
      %v977 = vsel %vm976, %v975, %v932
      %979 = vmatprep.subr.mxu0 0.0
      %980 = vmatpush1.msra.mxu0 %v950
      %981 = vmatprep.subr.mxu0 0.0
      %982 = vmatpush1.msra.mxu0 %v951
      %983 = vmatprep.subr.mxu0 0.0
      %984 = vmatpush1.msra.mxu0 %v952
      %985 = vmatprep.subr.mxu0 0.0
      %986 = vmatpush1.msra.mxu0 %v953
      %987 = vmatprep.subr.mxu0 0.0
      %988 = vmatpush1.msra.mxu0 %v954
      %989 = vmatprep.subr.mxu0 0.0
      %990 = vmatpush1.msra.mxu0 %v955
      %991 = vmatprep.subr.mxu0 0.0
      %992 = vmatpush1.msra.mxu0 %v956
      %993 = vmatprep.subr.mxu0 0.0
      %994 = vmatpush1.msra.mxu0 %v957
      %995 = vmatprep.subr.mxu0 0.0
      %996 = vmatpush1.msra.mxu0 %v958
      %997 = vmatprep.subr.mxu0 0.0
      %998 = vmatpush1.msra.mxu0 %v959
      %999 = vmatprep.subr.mxu0 0.0
      %1000 = vmatpush1.msra.mxu0 %v960
      %1001 = vmatprep.subr.mxu0 0.0
      %1002 = vmatpush1.msra.mxu0 %v961
      %1003 = vmatprep.subr.mxu0 0.0
      %1004 = vmatpush1.msra.mxu0 %v962
      %1005 = vmatprep.subr.mxu0 0.0
      %1006 = vmatpush1.msra.mxu0 %v963
      %1007 = vmatprep.subr.mxu0 0.0
      %1008 = vmatpush1.msra.mxu0 %v964
      %1009 = vmatprep.subr.mxu0 0.0
      %1010 = vmatpush1.msra.mxu0 %v965
      %1011 = vmatprep.subr.mxu0 0.0
      %1012 = vmatpush1.msra.mxu0 0.0
      %1013 = vmatprep.subr.mxu0 0.0
      %1014 = vmatpush1.msra.mxu0 0.0
      %1015 = vmatprep.subr.mxu0 0.0
      %1016 = vmatpush1.msra.mxu0 0.0
      %1017 = vmatprep.subr.mxu0 0.0
      %1018 = vmatpush1.msra.mxu0 0.0
      %1019 = vmatprep.subr.mxu0 0.0
      %1020 = vmatpush1.msra.mxu0 0.0
      %1021 = vmatprep.subr.mxu0 0.0
      %1022 = vmatpush1.msra.mxu0 0.0
      %1023 = vmatprep.subr.mxu0 0.0
      %1024 = vmatpush1.msra.mxu0 0.0
      %1025 = vmatprep.subr.mxu0 0.0
      %1026 = vmatpush1.msra.mxu0 0.0
      %1027 = vmatprep.subr.mxu0 0.0
      %1028 = vmatpush1.msra.mxu0 0.0
      %1029 = vmatprep.subr.mxu0 0.0
      %1030 = vmatpush1.msra.mxu0 0.0
      %1031 = vmatprep.subr.mxu0 0.0
      %1032 = vmatpush1.msra.mxu0 0.0
      %1033 = vmatprep.subr.mxu0 0.0
      %1034 = vmatpush1.msra.mxu0 0.0
      %1035 = vmatprep.subr.mxu0 0.0
      %1036 = vmatpush1.msra.mxu0 0.0
      %1037 = vmatprep.subr.mxu0 0.0
      %1038 = vmatpush1.msra.mxu0 0.0
      %1039 = vmatprep.subr.mxu0 0.0
      %1040 = vmatpush1.msra.mxu0 0.0
      %1041 = vmatprep.subr.mxu0 0.0
      %1042 = vmatpush1.msra.mxu0 0.0
      %1043 = vmatprep.mubr.f32.mxu0 0.0
      %1044 = vmatmul.mubr.f32.gmra.mrb[0].mxu0 %v977
      %v1045 = vpop.f32.mrb[0].mxu0
      %v1046 = vadd.f32 %v971, %v1045
      %v1047 = vpop.f32.mrb[0].mxu0
      %1048 = vdwg.mxu0
      %1049 = vst [vmem:[#allocation6] sm:$0x3] %v1046
    $region41: #{tpu_custom_call.1} parent=1 // pred_fallthru
      _
    // Predicated region
    $region42: #{tpu_custom_call.1} parent=1 // pred_check
      _
    $region43: #{tpu_custom_call.1} parent=1 // pred_check_branch
      %1051 = sbr.rel (0) target = $region45
    $region44: #{tpu_custom_call.1} parent=1 // pred_region
      %s1053 = ssub.s32 32, 32
      %1054 = vsyncadd [#allocation5], %s1053
      %s1056 = sshll.u32 [#allocation6], 4
      %s1057 = int_to_ptr.vmem [resolvable:$true] %s1056
      %1059 = dma.vmem_to_hbm [thread:$0]  %s1057, 32, %s7, [#allocation5]
    $region45: #{tpu_custom_call.1} parent=1 // pred_fallthru
      _
    // Predicated region
    $region46: #{tpu_custom_call.1} parent=1 // pred_check
      _
    $region47: #{tpu_custom_call.1} parent=1 // pred_check_branch
      %1061 = sbr.rel (0) target = $region49
    $region48: #{tpu_custom_call.1} parent=1 // pred_region
      %1062 = dma.done [#allocation5], 32
    $region49: #{tpu_custom_call.1} parent=1 // pred_fallthru
      _
    %1063 = vsyncpa [#allocation4], 1
    %1064 = vsyncpa [#allocation5], 1

// kernel: tpu_custom_call.1
$region0: #{tpu_custom_call.1}
  #allocation0 [shape = 'u32[]', space=smem, size = 0x4, offset = 0x4, fixed_abs, tag = 'smem constant byte address 0x4 - core index']
  #allocation1 [shape = 'u32[144,128]{1,0:T(1,128)}', space=vmem, size = 0x12000, scoped, tag = 'internal scratch']
  #allocation2 [shape = 'f32[2,16,32]{2,1,0:T(8,128)}', space=vmem, size = 0x4000, scoped, tag = 'scratch operand']
  %s0 = inlined_call_operand.vmem [shape: s32[2,16,1], index: 0, kind: input, shape index: {}]
  %s1 = inlined_call_operand.vmem [shape: bf16[128,32], index: 1, kind: input, shape index: {}]
  %s2 = inlined_call_operand.vmem [shape: bf16[160,128], index: 2, kind: input, shape index: {}]
  %s3 = inlined_call_operand.vmem [shape: f32[1,128], index: 3, kind: input, shape index: {}]
  %s4 = inlined_call_operand.vmem [shape: f32[14,128], index: 4, kind: input, shape index: {}]
  %s5 = inlined_call_operand.hbm [shape: bf16[128,128], index: 5, kind: input, shape index: {}]
  %s6 = inlined_call_operand.vmem [shape: f32[1,128], index: 6, kind: input, shape index: {}]
  %s7 = inlined_call_operand.hbm [shape: f32[2,128], index: 7, kind: output, shape index: {}]
  %s8 = sld [smem:[#allocation0]]
  $region50: #{tpu_custom_call.1} parent=0
    _
  %s10 = ssub.s32 1, %s8
  %s11 = scalar_select 0, %s10, %s8
  $region1: #{tpu_custom_call.1} parent=0
    #allocation3 [shape = 'u8[32768]{0}', space=vmem, size = 0x8000, scoped, tag = 'input window, operand 5, single buffered']
    #allocation4 [shape = 's32[1]{0}', space=sflag, size = 0x4, scoped, tag = 'scoped memory for tpu_custom_call.1']
    #allocation5 [shape = 's32[1]{0}', space=sflag, size = 0x4, scoped, tag = 'scoped memory for tpu_custom_call.1']
    #allocation6 [shape = 'u8[1024]{0}', space=vmem, size = 0x400, scoped, tag = 'output window, operand 0, single buffered']
    %12 = vsyncpa [#allocation4], 0
    %13 = vsyncpa [#allocation5], 0
    // Predicated region
    $region2: #{tpu_custom_call.1} parent=1 // pred_check
      _
    $region3: #{tpu_custom_call.1} parent=1 // pred_check_branch
      %15 = sbr.rel (0) target = $region5
    $region4: #{tpu_custom_call.1} parent=1 // pred_region
      _
    $region5: #{tpu_custom_call.1} parent=1 // pred_fallthru
      _
    // Predicated region
    $region6: #{tpu_custom_call.1} parent=1 // pred_check
      _
    $region7: #{tpu_custom_call.1} parent=1 // pred_check_branch
      %17 = sbr.rel (0) target = $region9
    $region8: #{tpu_custom_call.1} parent=1 // pred_region
      _
    $region9: #{tpu_custom_call.1} parent=1 // pred_fallthru
      _
    // Predicated region
    $region10: #{tpu_custom_call.1} parent=1 // pred_check
      _
    $region11: #{tpu_custom_call.1} parent=1 // pred_check_branch
      %19 = sbr.rel (0) target = $region13
    $region12: #{tpu_custom_call.1} parent=1 // pred_region
      _
    $region13: #{tpu_custom_call.1} parent=1 // pred_fallthru
      _
    // Predicated region
    $region14: #{tpu_custom_call.1} parent=1 // pred_check
      _
    $region15: #{tpu_custom_call.1} parent=1 // pred_check_branch
      %21 = sbr.rel (0) target = $region17
    $region16: #{tpu_custom_call.1} parent=1 // pred_region
      _
    $region17: #{tpu_custom_call.1} parent=1 // pred_fallthru
      _
    // Predicated region
    $region18: #{tpu_custom_call.1} parent=1 // pred_check
      _
    $region19: #{tpu_custom_call.1} parent=1 // pred_check_branch
      %23 = sbr.rel (0) target = $region21
    $region20: #{tpu_custom_call.1} parent=1 // pred_region
      _
    $region21: #{tpu_custom_call.1} parent=1 // pred_fallthru
      _
    // Predicated region
    $region22: #{tpu_custom_call.1} parent=1 // pred_check
      _
    $region23: #{tpu_custom_call.1} parent=1 // pred_check_branch
      %25 = sbr.rel (0) target = $region25
    $region24: #{tpu_custom_call.1} parent=1 // pred_region
      %s27 = ssub.s32 1024, 1024
      %28 = vsyncadd [#allocation4], %s27
      %s29 = sshll.u32 [#allocation3], 4
      %s30 = int_to_ptr.vmem [resolvable:$true] %s29
      %35 = dma.hbm_to_vmem [thread:$0]  %s5, 1024, %s30, [#allocation4], 64, 64, 4
    $region25: #{tpu_custom_call.1} parent=1 // pred_fallthru
      _
    // Predicated region
    $region26: #{tpu_custom_call.1} parent=1 // pred_check
      _
    $region27: #{tpu_custom_call.1} parent=1 // pred_check_branch
      %37 = sbr.rel (0) target = $region29
    $region28: #{tpu_custom_call.1} parent=1 // pred_region
      _
    $region29: #{tpu_custom_call.1} parent=1 // pred_fallthru
      _
    // Predicated region
    $region30: #{tpu_custom_call.1} parent=1 // pred_check
      _
    $region31: #{tpu_custom_call.1} parent=1 // pred_check_branch
      %39 = sbr.rel (0) target = $region33
    $region32: #{tpu_custom_call.1} parent=1 // pred_region
      %40 = dma.done [#allocation4], 1024
    $region33: #{tpu_custom_call.1} parent=1 // pred_fallthru
      _
    %p42 = scmp.eq.s32.totalorder 0, 0
    // Predicated region
    $region34: #{tpu_custom_call.1} parent=1 // pred_check
      %p43 = pneg %p42
    $region35: #{tpu_custom_call.1} parent=1 // pred_check_branch
      %45 = sbr.rel (%p43) target = $region37
    $region36: #{tpu_custom_call.1} parent=1 // pred_region
      %vm46 = vcmask 261120
      %47 = vst.msk [vmem:[#allocation2] sm:$0xff] %vm46, 0.0
      %48 = vst.msk [vmem:[#allocation2 + $0x8] sm:$0xff] %vm46, 0.0
      %49 = vst.msk [vmem:[#allocation2 + $0x10] sm:$0xff] %vm46, 0.0
      %50 = vst.msk [vmem:[#allocation2 + $0x18] sm:$0xff] %vm46, 0.0
    $region37: #{tpu_custom_call.1} parent=1 // pred_fallthru
      _
    %v51 = vld [vmem:[%s0] sm:$0xff]
    %v52 = vld [vmem:[%s0 + $0x8] sm:$0xff]
    %v53 = vld [vmem:[%s0 + $0x10] sm:$0xff]
    %v54 = vld [vmem:[%s0 + $0x18] sm:$0xff]
    %v55 = vld [vmem:[%s1] sm:$0xf]
    %v56 = vld [vmem:[%s1 + $0x4] sm:$0xf]
    %v57 = vld [vmem:[%s1 + $0x8] sm:$0xf]
    %v58 = vld [vmem:[%s1 + $0xc] sm:$0xf]
    %v59 = vld [vmem:[%s1 + $0x10] sm:$0xf]
    %v60 = vld [vmem:[%s1 + $0x14] sm:$0xf]
    %v61 = vld [vmem:[%s1 + $0x18] sm:$0xf]
    %v62 = vld [vmem:[%s1 + $0x1c] sm:$0xf]
    %v63 = vld [vmem:[%s1 + $0x20] sm:$0xf]
    %v64 = vld [vmem:[%s1 + $0x24] sm:$0xf]
    %v65 = vld [vmem:[%s1 + $0x28] sm:$0xf]
    %v66 = vld [vmem:[%s1 + $0x2c] sm:$0xf]
    %v67 = vld [vmem:[%s1 + $0x30] sm:$0xf]
    %v68 = vld [vmem:[%s1 + $0x34] sm:$0xf]
    %v69 = vld [vmem:[%s1 + $0x38] sm:$0xf]
    %v70 = vld [vmem:[%s1 + $0x3c] sm:$0xf]
    %v71 = vlaneseq
    %v72 = vand.u32 %v71, 127
    %s73 = smul.u32 0, 128
    %v74 = vstv %s73
    %v75 = vadd.s32 %v72, %v74
    %76 = vset.pattern.permute.xlu0 0
    %77 = vperm.xlu0 %76, %v51
    %v78 = vpop.permute.xlu0 %77
    %79 = vset.pattern.permute.xlu0 0
    %80 = vperm.xlu0 %79, %v52
    %v81 = vpop.permute.xlu0 %80
    %82 = vset.pattern.permute.xlu0 0
    %83 = vperm.xlu0 %82, %v53
    %v84 = vpop.permute.xlu0 %83
    %85 = vset.pattern.permute.xlu0 0
    %86 = vperm.xlu0 %85, %v54
    %v87 = vpop.permute.xlu0 %86
    %vm88 = vcmp.eq.s32.totalorder %v78, %v75
    %vm89 = vcmp.eq.s32.totalorder %v81, %v75
    %vm90 = vcmp.eq.s32.totalorder %v84, %v75
    %vm91 = vcmp.eq.s32.totalorder %v87, %v75
    %v92 = vsel %vm88, 1.0, 0.0
    %v93 = vsel %vm89, 1.0, 0.0
    %v94 = vsel %vm90, 1.0, 0.0
    %v95 = vsel %vm91, 1.0, 0.0
    %v96 = vpack.c.bf16 %v93, %v92
    %v97 = vpack.c.bf16 %v95, %v94
    %v98 = vld [vmem:[#allocation2] sm:$0xff]
    %v99 = vld [vmem:[#allocation2 + $0x8] sm:$0xff]
    %v100 = vld [vmem:[#allocation2 + $0x10] sm:$0xff]
    %v101 = vld [vmem:[#allocation2 + $0x18] sm:$0xff]
    %v118 = vunpack.c.l.b16 %v55
    %v119 = vunpack.c.l.b16 %v56
    %v120 = vunpack.c.l.b16 %v57
    %v121 = vunpack.c.l.b16 %v58
    %v122 = vunpack.c.l.b16 %v59
    %v123 = vunpack.c.l.b16 %v60
    %v124 = vunpack.c.l.b16 %v61
    %v125 = vunpack.c.l.b16 %v62
    %v126 = vunpack.c.l.b16 %v63
    %v127 = vunpack.c.l.b16 %v64
    %v128 = vunpack.c.l.b16 %v65
    %v129 = vunpack.c.l.b16 %v66
    %v130 = vunpack.c.l.b16 %v67
    %v131 = vunpack.c.l.b16 %v68
    %v132 = vunpack.c.l.b16 %v69
    %v133 = vunpack.c.l.b16 %v70
    %v134 = vpack.c.b16 %v119, %v118
    %v135 = vpack.c.b16 %v121, %v120
    %v136 = vpack.c.b16 %v123, %v122
    %v137 = vpack.c.b16 %v125, %v124
    %v138 = vpack.c.b16 %v127, %v126
    %v139 = vpack.c.b16 %v129, %v128
    %v140 = vpack.c.b16 %v131, %v130
    %v141 = vpack.c.b16 %v133, %v132
    %150 = vmatprep.subr.bf16.mxu0 0
    %151 = vmatpush1.bf16.msra.mxu0 %v134
    %152 = vmatprep.subr.bf16.mxu0 0
    %153 = vmatpush1.bf16.msra.mxu0 %v135
    %154 = vmatprep.subr.bf16.mxu0 0
    %155 = vmatpush1.bf16.msra.mxu0 %v136
    %156 = vmatprep.subr.bf16.mxu0 0
    %157 = vmatpush1.bf16.msra.mxu0 %v137
    %158 = vmatprep.subr.bf16.mxu0 0
    %159 = vmatpush1.bf16.msra.mxu0 %v138
    %160 = vmatprep.subr.bf16.mxu0 0
    %161 = vmatpush1.bf16.msra.mxu0 %v139
    %162 = vmatprep.subr.bf16.mxu0 0
    %163 = vmatpush1.bf16.msra.mxu0 %v140
    %164 = vmatprep.subr.bf16.mxu0 0
    %165 = vmatpush1.bf16.msra.mxu0 %v141
    %166 = vmatprep.subr.bf16.mxu0 0
    %167 = vmatpush1.bf16.msra.mxu0 0
    %168 = vmatprep.subr.bf16.mxu0 0
    %169 = vmatpush1.bf16.msra.mxu0 0
    %170 = vmatprep.subr.bf16.mxu0 0
    %171 = vmatpush1.bf16.msra.mxu0 0
    %172 = vmatprep.subr.bf16.mxu0 0
    %173 = vmatpush1.bf16.msra.mxu0 0
    %174 = vmatprep.subr.bf16.mxu0 0
    %175 = vmatpush1.bf16.msra.mxu0 0
    %176 = vmatprep.subr.bf16.mxu0 0
    %177 = vmatpush1.bf16.msra.mxu0 0
    %178 = vmatprep.subr.bf16.mxu0 0
    %179 = vmatpush1.bf16.msra.mxu0 0
    %180 = vmatprep.subr.bf16.mxu0 0
    %181 = vmatpush1.bf16.msra.mxu0 0
    %182 = vmatprep.mubr.bf16.mxu0 0
    %183 = vmatmul.mubr.bf16.gmra.mrb[0].mxu0 %v96
    %v184 = vpop.f32.mrb[0].mxu0
    %v185 = vadd.f32 0.0, %v184
    %v186 = vpop.f32.mrb[0].mxu0
    %v187 = vpop.f32.mrb[0].mxu0
    %v188 = vadd.f32 0.0, %v187
    %v189 = vpop.f32.mrb[0].mxu0
    %190 = vmatprep.mubr.bf16.mxu0 0
    %191 = vmatmul.mubr.bf16.gmra.mrb[0].mxu0 %v97
    %v192 = vpop.f32.mrb[0].mxu0
    %v193 = vadd.f32 0.0, %v192
    %v194 = vpop.f32.mrb[0].mxu0
    %v195 = vpop.f32.mrb[0].mxu0
    %v196 = vadd.f32 0.0, %v195
    %v197 = vpop.f32.mrb[0].mxu0
    %198 = vdwg.mxu0
    %v199 = vadd.f32 %v98, %v185
    %v200 = vadd.f32 %v99, %v188
    %v201 = vadd.f32 %v100, %v193
    %v202 = vadd.f32 %v101, %v196
    %vm203 = vcmask 261120
    %204 = vst.msk [vmem:[#allocation2] sm:$0xff] %vm203, %v199
    %205 = vst.msk [vmem:[#allocation2 + $0x8] sm:$0xff] %vm203, %v200
    %206 = vst.msk [vmem:[#allocation2 + $0x10] sm:$0xff] %vm203, %v201
    %207 = vst.msk [vmem:[#allocation2 + $0x18] sm:$0xff] %vm203, %v202
    // Predicated region
    $region38: #{tpu_custom_call.1} parent=1 // pred_check
      %p208 = pneg %p42
    $region39: #{tpu_custom_call.1} parent=1 // pred_check_branch
      %210 = sbr.rel (%p208) target = $region41
    $region40: #{tpu_custom_call.1} parent=1 // pred_region
      %v211 = vld [vmem:[#allocation2] sm:$0xff]
      %v212 = vld [vmem:[#allocation2 + $0x8] sm:$0xff]
      %v213 = vld [vmem:[#allocation2 + $0x10] sm:$0xff]
      %v214 = vld [vmem:[#allocation2 + $0x18] sm:$0xff]
      %vm219 = vcmask 1046528
      %v220 = vrot.slane %v211, 1
      %v221 = vrot.slane %v212, 1
      %v222 = vsel %vm219, %v220, %v221
      %v223 = vrot.slane %v213, 1
      %v224 = vrot.slane %v214, 1
      %v225 = vsel %vm219, %v223, %v224
      %226 = vrot.lane.b32.xlu0 %v222, 32
      %v227 = vpop.permute.xlu0 %226
      %228 = vrot.lane.b32.xlu0 %v221, 32
      %v229 = vpop.permute.xlu0 %228
      %230 = vrot.lane.b32.xlu0 %v225, 32
      %v231 = vpop.permute.xlu0 %230
      %232 = vrot.lane.b32.xlu0 %v224, 32
      %v233 = vpop.permute.xlu0 %232
      %vm238 = vcmask 1045504
      %v239 = vrot.slane %v211, 2
      %v240 = vrot.slane %v212, 2
      %v241 = vsel %vm238, %v239, %v240
      %v242 = vrot.slane %v213, 2
      %v243 = vrot.slane %v214, 2
      %v244 = vsel %vm238, %v242, %v243
      %245 = vrot.lane.b32.xlu0 %v241, 64
      %v246 = vpop.permute.xlu0 %245
      %247 = vrot.lane.b32.xlu0 %v240, 64
      %v248 = vpop.permute.xlu0 %247
      %249 = vrot.lane.b32.xlu0 %v244, 64
      %v250 = vpop.permute.xlu0 %249
      %251 = vrot.lane.b32.xlu0 %v243, 64
      %v252 = vpop.permute.xlu0 %251
      %vm258 = vcmask 1044480
      %v259 = vrot.slane %v211, 3
      %v260 = vrot.slane %v212, 3
      %v261 = vsel %vm258, %v259, %v260
      %v262 = vrot.slane 0.0, 3
      %v263 = vsel %vm258, %v260, %v262
      %v264 = vrot.slane %v213, 3
      %v265 = vrot.slane %v214, 3
      %v266 = vsel %vm258, %v264, %v265
      %v267 = vsel %vm258, %v265, %v262
      %268 = vrot.lane.b32.xlu0 %v261, 96
      %v269 = vpop.permute.xlu0 %268
      %270 = vrot.lane.b32.xlu0 %v263, 96
      %v271 = vpop.permute.xlu0 %270
      %272 = vrot.lane.b32.xlu0 %v266, 96
      %v273 = vpop.permute.xlu0 %272
      %274 = vrot.lane.b32.xlu0 %v267, 96
      %v275 = vpop.permute.xlu0 %274
      %vm280 = vcmask 1043456
      %v281 = vrot.slane %v211, 4
      %v282 = vrot.slane %v212, 4
      %v283 = vsel %vm280, %v281, %v282
      %v284 = vrot.slane 0.0, 4
      %v285 = vsel %vm280, %v282, %v284
      %v286 = vrot.slane %v213, 4
      %v287 = vrot.slane %v214, 4
      %v288 = vsel %vm280, %v286, %v287
      %v289 = vsel %vm280, %v287, %v284
      %v294 = vsel %vm203, %v211, %v227
      %v295 = vsel %vm203, %v212, %v229
      %v296 = vsel %vm203, %v213, %v231
      %v297 = vsel %vm203, %v214, %v233
      %vm298 = vcmask 523264
      %v299 = vsel %vm298, %v294, %v246
      %v300 = vsel %vm298, %v295, %v248
      %v301 = vsel %vm298, %v296, %v250
      %v302 = vsel %vm298, %v297, %v252
      %vm303 = vcmask 785408
      %v304 = vsel %vm303, %v299, %v269
      %v305 = vsel %vm303, %v300, %v271
      %v306 = vsel %vm303, %v301, %v273
      %v307 = vsel %vm303, %v302, %v275
      %v308 = vpack.c.bf16 %v305, %v304
      %v309 = vpack.c.bf16 %v285, %v283
      %v310 = vpack.c.bf16 %v307, %v306
      %v311 = vpack.c.bf16 %v289, %v288
      %v312 = vld [vmem:[%s2] sm:$0xf]
      %v313 = vld [vmem:[%s2 + $0x4] sm:$0xf]
      %v314 = vld [vmem:[%s2 + $0x8] sm:$0xf]
      %v315 = vld [vmem:[%s2 + $0xc] sm:$0xf]
      %v316 = vld [vmem:[%s2 + $0x10] sm:$0xf]
      %v317 = vld [vmem:[%s2 + $0x14] sm:$0xf]
      %v318 = vld [vmem:[%s2 + $0x18] sm:$0xf]
      %v319 = vld [vmem:[%s2 + $0x1c] sm:$0xf]
      %v320 = vld [vmem:[%s2 + $0x20] sm:$0xf]
      %v321 = vld [vmem:[%s2 + $0x24] sm:$0xf]
      %v322 = vld [vmem:[%s2 + $0x28] sm:$0xf]
      %v323 = vld [vmem:[%s2 + $0x2c] sm:$0xf]
      %v324 = vld [vmem:[%s2 + $0x30] sm:$0xf]
      %v325 = vld [vmem:[%s2 + $0x34] sm:$0xf]
      %v326 = vld [vmem:[%s2 + $0x38] sm:$0xf]
      %v327 = vld [vmem:[%s2 + $0x3c] sm:$0xf]
      %v328 = vld [vmem:[%s2 + $0x40] sm:$0xf]
      %v329 = vld [vmem:[%s2 + $0x44] sm:$0xf]
      %v330 = vld [vmem:[%s2 + $0x48] sm:$0xf]
      %v331 = vld [vmem:[%s2 + $0x4c] sm:$0xf]
      %v332 = vld [vmem:[%s4] sm:$0xff]
      %v333 = vld [vmem:[%s4 + $0x8] sm:$0x3f]
      %v338 = vcombine.low %v308, %v309
      %v339 = vcombine.high %v308, %v309
      %v341 = vunpack.c.l.s4 1966171168
      %v342 = vunpack.c.0.s8 %v341
      %v343 = vlaneseq
      %v344 = vshrl.u32 %v343, 7
      %v345 = vsub.s32 %v342, %v344
      %v346 = vrot.slane %v338, %v345
      %v348 = vunpack.c.l.s4 1966171168
      %v349 = vunpack.c.0.s8 %v348
      %v350 = vlaneseq
      %v351 = vshrl.u32 %v350, 7
      %v352 = vsub.s32 %v349, %v351
      %v353 = vrot.slane %v339, %v352
      %v354 = vcombine.high %v346, %v346
      %v355 = vcombine.high %v353, %v353
      %v357 = vunpack.c.l.s4 1966171168
      %v358 = vunpack.c.0.s8 %v357
      %v359 = vlaneseq
      %v360 = vshrl.u32 %v359, 7
      %v361 = vsub.s32 %v358, %v360
      %v362 = vrot.slane %v346, %v361
      %v364 = vunpack.c.l.s4 1966171168
      %v365 = vunpack.c.0.s8 %v364
      %v366 = vlaneseq
      %v367 = vshrl.u32 %v366, 7
      %v368 = vsub.s32 %v365, %v367
      %v369 = vrot.slane %v353, %v368
      %v371 = vunpack.c.l.s4 1966171168
      %v372 = vunpack.c.0.s8 %v371
      %v373 = vlaneseq
      %v374 = vshrl.u32 %v373, 7
      %v375 = vsub.s32 %v372, %v374
      %v376 = vrot.slane %v354, %v375
      %v378 = vunpack.c.l.s4 1966171168
      %v379 = vunpack.c.0.s8 %v378
      %v380 = vlaneseq
      %v381 = vshrl.u32 %v380, 7
      %v382 = vsub.s32 %v379, %v381
      %v383 = vrot.slane %v355, %v382
      %v384 = vcombine.high %v362, %v362
      %v385 = vcombine.high %v369, %v369
      %v386 = vcombine.high %v376, %v376
      %v387 = vcombine.low %v310, %v311
      %v388 = vcombine.high %v310, %v311
      %v390 = vunpack.c.l.s4 1966171168
      %v391 = vunpack.c.0.s8 %v390
      %v392 = vlaneseq
      %v393 = vshrl.u32 %v392, 7
      %v394 = vsub.s32 %v391, %v393
      %v395 = vrot.slane %v387, %v394
      %v397 = vunpack.c.l.s4 1966171168
      %v398 = vunpack.c.0.s8 %v397
      %v399 = vlaneseq
      %v400 = vshrl.u32 %v399, 7
      %v401 = vsub.s32 %v398, %v400
      %v402 = vrot.slane %v388, %v401
      %v403 = vcombine.high %v395, %v395
      %v404 = vcombine.high %v402, %v402
      %v406 = vunpack.c.l.s4 1966171168
      %v407 = vunpack.c.0.s8 %v406
      %v408 = vlaneseq
      %v409 = vshrl.u32 %v408, 7
      %v410 = vsub.s32 %v407, %v409
      %v411 = vrot.slane %v395, %v410
      %v413 = vunpack.c.l.s4 1966171168
      %v414 = vunpack.c.0.s8 %v413
      %v415 = vlaneseq
      %v416 = vshrl.u32 %v415, 7
      %v417 = vsub.s32 %v414, %v416
      %v418 = vrot.slane %v402, %v417
      %v420 = vunpack.c.l.s4 1966171168
      %v421 = vunpack.c.0.s8 %v420
      %v422 = vlaneseq
      %v423 = vshrl.u32 %v422, 7
      %v424 = vsub.s32 %v421, %v423
      %v425 = vrot.slane %v403, %v424
      %v427 = vunpack.c.l.s4 1966171168
      %v428 = vunpack.c.0.s8 %v427
      %v429 = vlaneseq
      %v430 = vshrl.u32 %v429, 7
      %v431 = vsub.s32 %v428, %v430
      %v432 = vrot.slane %v404, %v431
      %v433 = vcombine.high %v411, %v411
      %v434 = vcombine.high %v418, %v418
      %v435 = vcombine.high %v425, %v425
      %v438 = vcombine.high %v332, %v332
      %v440 = vunpack.c.l.s4 1983009808
      %v441 = vunpack.c.0.s8 %v440
      %v442 = vlaneseq
      %v443 = vshrl.u32 %v442, 7
      %v444 = vsub.s32 %v441, %v443
      %v445 = vrot.slane %v332, %v444
      %v447 = vunpack.c.l.s4 1983009808
      %v448 = vunpack.c.0.s8 %v447
      %v449 = vlaneseq
      %v450 = vshrl.u32 %v449, 7
      %v451 = vsub.s32 %v448, %v450
      %v452 = vrot.slane %v438, %v451
      %v453 = vcombine.high %v445, %v445
      %v454 = vcombine.high %v452, %v452
      %v455 = vcombine.high %v333, %v333
      %v457 = vunpack.c.l.s4 1983009808
      %v458 = vunpack.c.0.s8 %v457
      %v459 = vlaneseq
      %v460 = vshrl.u32 %v459, 7
      %v461 = vsub.s32 %v458, %v460
      %v462 = vrot.slane %v333, %v461
      %v464 = vunpack.c.l.s4 1983009808
      %v465 = vunpack.c.0.s8 %v464
      %v466 = vlaneseq
      %v467 = vshrl.u32 %v466, 7
      %v468 = vsub.s32 %v465, %v467
      %v469 = vrot.slane %v455, %v468
      %v470 = vcombine.high %v462, %v462
      %v471 = vcombine.low %v362, %v376
      %v472 = vcombine.low %v384, %v386
      %v473 = vcombine.low %v369, %v383
      %v474 = vcombine.low %v385, %v411
      %v476 = vunpack.c.l.s4 1966171168
      %v477 = vunpack.c.0.s8 %v476
      %v478 = vlaneseq
      %v479 = vshrl.u32 %v478, 7
      %v480 = vsub.s32 %v477, %v479
      %v481 = vrot.slane %v471, %v480
      %v483 = vunpack.c.l.s4 1966171168
      %v484 = vunpack.c.0.s8 %v483
      %v485 = vlaneseq
      %v486 = vshrl.u32 %v485, 7
      %v487 = vsub.s32 %v484, %v486
      %v488 = vrot.slane %v472, %v487
      %v490 = vunpack.c.l.s4 1966171168
      %v491 = vunpack.c.0.s8 %v490
      %v492 = vlaneseq
      %v493 = vshrl.u32 %v492, 7
      %v494 = vsub.s32 %v491, %v493
      %v495 = vrot.slane %v473, %v494
      %v497 = vunpack.c.l.s4 1966171168
      %v498 = vunpack.c.0.s8 %v497
      %v499 = vlaneseq
      %v500 = vshrl.u32 %v499, 7
      %v501 = vsub.s32 %v498, %v500
      %v502 = vrot.slane %v474, %v501
      %v503 = vcombine.low %v481, %v488
      %v504 = vcombine.high %v481, %v488
      %v505 = vcombine.low %v495, %v502
      %v506 = vcombine.high %v495, %v502
      %v508 = vunpack.c.l.s4 1966171168
      %v509 = vunpack.c.0.s8 %v508
      %v510 = vlaneseq
      %v511 = vshrl.u32 %v510, 7
      %v512 = vsub.s32 %v509, %v511
      %v513 = vrot.slane %v503, %v512
      %v515 = vunpack.c.l.s4 1966171168
      %v516 = vunpack.c.0.s8 %v515
      %v517 = vlaneseq
      %v518 = vshrl.u32 %v517, 7
      %v519 = vsub.s32 %v516, %v518
      %v520 = vrot.slane %v504, %v519
      %v522 = vunpack.c.l.s4 1966171168
      %v523 = vunpack.c.0.s8 %v522
      %v524 = vlaneseq
      %v525 = vshrl.u32 %v524, 7
      %v526 = vsub.s32 %v523, %v525
      %v527 = vrot.slane %v505, %v526
      %v529 = vunpack.c.l.s4 1966171168
      %v530 = vunpack.c.0.s8 %v529
      %v531 = vlaneseq
      %v532 = vshrl.u32 %v531, 7
      %v533 = vsub.s32 %v530, %v532
      %v534 = vrot.slane %v506, %v533
      %v535 = vcombine.low %v513, %v527
      %v536 = vcombine.low %v520, %v534
      %v537 = vcombine.low %v425, %v433
      %v538 = vcombine.low %v435, %v418
      %v539 = vcombine.low %v432, %v434
      %v541 = vunpack.c.l.s4 1966171168
      %v542 = vunpack.c.0.s8 %v541
      %v543 = vlaneseq
      %v544 = vshrl.u32 %v543, 7
      %v545 = vsub.s32 %v542, %v544
      %v546 = vrot.slane %v537, %v545
      %v548 = vunpack.c.l.s4 1966171168
      %v549 = vunpack.c.0.s8 %v548
      %v550 = vlaneseq
      %v551 = vshrl.u32 %v550, 7
      %v552 = vsub.s32 %v549, %v551
      %v553 = vrot.slane %v538, %v552
      %v555 = vunpack.c.l.s4 1966171168
      %v556 = vunpack.c.0.s8 %v555
      %v557 = vlaneseq
      %v558 = vshrl.u32 %v557, 7
      %v559 = vsub.s32 %v556, %v558
      %v560 = vrot.slane %v539, %v559
      %v561 = vcombine.low %v546, %v553
      %v562 = vcombine.high %v546, %v553
      %v563 = vcombine.high %v560, %v560
      %v565 = vunpack.c.l.s4 1966171168
      %v566 = vunpack.c.0.s8 %v565
      %v567 = vlaneseq
      %v568 = vshrl.u32 %v567, 7
      %v569 = vsub.s32 %v566, %v568
      %v570 = vrot.slane %v561, %v569
      %v572 = vunpack.c.l.s4 1966171168
      %v573 = vunpack.c.0.s8 %v572
      %v574 = vlaneseq
      %v575 = vshrl.u32 %v574, 7
      %v576 = vsub.s32 %v573, %v575
      %v577 = vrot.slane %v562, %v576
      %v579 = vunpack.c.l.s4 1966171168
      %v580 = vunpack.c.0.s8 %v579
      %v581 = vlaneseq
      %v582 = vshrl.u32 %v581, 7
      %v583 = vsub.s32 %v580, %v582
      %v584 = vrot.slane %v560, %v583
      %v586 = vunpack.c.l.s4 1966171168
      %v587 = vunpack.c.0.s8 %v586
      %v588 = vlaneseq
      %v589 = vshrl.u32 %v588, 7
      %v590 = vsub.s32 %v587, %v589
      %v591 = vrot.slane %v563, %v590
      %v592 = vcombine.low %v570, %v584
      %v593 = vcombine.low %v577, %v591
      %v616 = vunpack.c.l.b16 %v312
      %v617 = vunpack.c.l.b16 %v313
      %v618 = vunpack.c.l.b16 %v314
      %v619 = vunpack.c.l.b16 %v315
      %v620 = vunpack.c.l.b16 %v316
      %v621 = vunpack.c.l.b16 %v317
      %v622 = vunpack.c.l.b16 %v318
      %v623 = vunpack.c.l.b16 %v319
      %v624 = vunpack.c.l.b16 %v320
      %v625 = vunpack.c.l.b16 %v321
      %v626 = vunpack.c.l.b16 %v322
      %v627 = vunpack.c.l.b16 %v323
      %v628 = vunpack.c.l.b16 %v324
      %v629 = vunpack.c.l.b16 %v325
      %v630 = vunpack.c.l.b16 %v326
      %v631 = vunpack.c.l.b16 %v327
      %v632 = vunpack.c.l.b16 %v328
      %v633 = vunpack.c.l.b16 %v329
      %v634 = vunpack.c.l.b16 %v330
      %v635 = vunpack.c.l.b16 %v331
      %v636 = vpack.c.b16 %v617, %v616
      %v637 = vpack.c.b16 %v619, %v618
      %v638 = vpack.c.b16 %v621, %v620
      %v639 = vpack.c.b16 %v623, %v622
      %v640 = vpack.c.b16 %v625, %v624
      %v641 = vpack.c.b16 %v627, %v626
      %v642 = vpack.c.b16 %v629, %v628
      %v643 = vpack.c.b16 %v631, %v630
      %v644 = vpack.c.b16 %v633, %v632
      %v645 = vpack.c.b16 %v635, %v634
      %v656 = vcombine.low %v445, %v453
      %v657 = vcombine.low %v452, %v454
      %v659 = vunpack.c.l.s4 1983009808
      %v660 = vunpack.c.0.s8 %v659
      %v661 = vlaneseq
      %v662 = vshrl.u32 %v661, 7
      %v663 = vsub.s32 %v660, %v662
      %v664 = vrot.slane %v656, %v663
      %v666 = vunpack.c.l.s4 1983009808
      %v667 = vunpack.c.0.s8 %v666
      %v668 = vlaneseq
      %v669 = vshrl.u32 %v668, 7
      %v670 = vsub.s32 %v667, %v669
      %v671 = vrot.slane %v657, %v670
      %v672 = vcombine.low %v664, %v671
      %v673 = vcombine.low %v462, %v470
      %v674 = vcombine.low %v469, %v445
      %v676 = vunpack.c.l.s4 1983009808
      %v677 = vunpack.c.0.s8 %v676
      %v678 = vlaneseq
      %v679 = vshrl.u32 %v678, 7
      %v680 = vsub.s32 %v677, %v679
      %v681 = vrot.slane %v673, %v680
      %v683 = vunpack.c.l.s4 1983009808
      %v684 = vunpack.c.0.s8 %v683
      %v685 = vlaneseq
      %v686 = vshrl.u32 %v685, 7
      %v687 = vsub.s32 %v684, %v686
      %v688 = vrot.slane %v674, %v687
      %v689 = vcombine.low %v681, %v688
      %v690 = vcombine.low %v453, %v452
      %v691 = vcombine.low %v454, %v462
      %v693 = vunpack.c.l.s4 1983009808
      %v694 = vunpack.c.0.s8 %v693
      %v695 = vlaneseq
      %v696 = vshrl.u32 %v695, 7
      %v697 = vsub.s32 %v694, %v696
      %v698 = vrot.slane %v690, %v697
      %v700 = vunpack.c.l.s4 1983009808
      %v701 = vunpack.c.0.s8 %v700
      %v702 = vlaneseq
      %v703 = vshrl.u32 %v702, 7
      %v704 = vsub.s32 %v701, %v703
      %v705 = vrot.slane %v691, %v704
      %v706 = vcombine.low %v698, %v705
      %v707 = vcombine.low %v470, %v469
      %v709 = vunpack.c.l.s4 1983009808
      %v710 = vunpack.c.0.s8 %v709
      %v711 = vlaneseq
      %v712 = vshrl.u32 %v711, 7
      %v713 = vsub.s32 %v710, %v712
      %v714 = vrot.slane %v707, %v713
      %v720 = vsel %vm203, %v536, 0
      %v723 = vsel %vm203, %v593, 0
      %725 = vmatprep.subr.bf16.mxu0 0
      %726 = vmatpush1.bf16.msra.mxu0 %v636
      %727 = vmatprep.subr.bf16.mxu0 0
      %728 = vmatpush1.bf16.msra.mxu0 %v637
      %729 = vmatprep.subr.bf16.mxu0 0
      %730 = vmatpush1.bf16.msra.mxu0 %v638
      %731 = vmatprep.subr.bf16.mxu0 0
      %732 = vmatpush1.bf16.msra.mxu0 %v639
      %733 = vmatprep.subr.bf16.mxu0 0
      %734 = vmatpush1.bf16.msra.mxu0 %v640
      %735 = vmatprep.subr.bf16.mxu0 0
      %736 = vmatpush1.bf16.msra.mxu0 %v641
      %737 = vmatprep.subr.bf16.mxu0 0
      %738 = vmatpush1.bf16.msra.mxu0 %v642
      %739 = vmatprep.subr.bf16.mxu0 0
      %740 = vmatpush1.bf16.msra.mxu0 %v643
      %741 = vmatprep.subr.bf16.mxu0 0
      %742 = vmatpush1.bf16.msra.mxu0 %v644
      %743 = vmatprep.subr.bf16.mxu0 0
      %744 = vmatpush1.bf16.msra.mxu0 %v645
      %745 = vmatprep.subr.bf16.mxu0 0
      %746 = vmatpush1.bf16.msra.mxu0 0
      %747 = vmatprep.subr.bf16.mxu0 0
      %748 = vmatpush1.bf16.msra.mxu0 0
      %749 = vmatprep.subr.bf16.mxu0 0
      %750 = vmatpush1.bf16.msra.mxu0 0
      %751 = vmatprep.subr.bf16.mxu0 0
      %752 = vmatpush1.bf16.msra.mxu0 0
      %753 = vmatprep.subr.bf16.mxu0 0
      %754 = vmatpush1.bf16.msra.mxu0 0
      %755 = vmatprep.subr.bf16.mxu0 0
      %756 = vmatpush1.bf16.msra.mxu0 0
      %757 = vmatprep.mubr.bf16.mxu0 %v720
      %758 = vmatmul.mubr.bf16.gmra.mrb[0].mxu0 %v535
      %v759 = vpop.f32.mrb[0].mxu0
      %v760 = vadd.f32 %v672, %v759
      %v761 = vpop.f32.mrb[0].mxu0
      %v762 = vpop.f32.mrb[0].mxu0
      %v763 = vadd.f32 %v689, %v762
      %v764 = vpop.f32.mrb[0].mxu0
      %765 = vmatprep.mubr.bf16.mxu0 %v723
      %766 = vmatmul.mubr.bf16.gmra.mrb[0].mxu0 %v592
      %v767 = vpop.f32.mrb[0].mxu0
      %v768 = vadd.f32 %v706, %v767
      %v769 = vpop.f32.mrb[0].mxu0
      %v770 = vpop.f32.mrb[0].mxu0
      %v771 = vadd.f32 %v714, %v770
      %v772 = vpop.f32.mrb[0].mxu0
      %773 = vdwg.mxu0
      %v778 = vcombine.high %v760, %v760
      %v780 = vunpack.c.l.s4 1983009808
      %v781 = vunpack.c.0.s8 %v780
      %v782 = vlaneseq
      %v783 = vshrl.u32 %v782, 7
      %v784 = vsub.s32 %v781, %v783
      %v785 = vrot.slane %v760, %v784
      %v787 = vunpack.c.l.s4 1983009808
      %v788 = vunpack.c.0.s8 %v787
      %v789 = vlaneseq
      %v790 = vshrl.u32 %v789, 7
      %v791 = vsub.s32 %v788, %v790
      %v792 = vrot.slane %v778, %v791
      %v793 = vcombine.high %v785, %v785
      %v794 = vcombine.high %v792, %v792
      %v795 = vcombine.high %v763, %v763
      %v797 = vunpack.c.l.s4 1983009808
      %v798 = vunpack.c.0.s8 %v797
      %v799 = vlaneseq
      %v800 = vshrl.u32 %v799, 7
      %v801 = vsub.s32 %v798, %v800
      %v802 = vrot.slane %v763, %v801
      %v804 = vunpack.c.l.s4 1983009808
      %v805 = vunpack.c.0.s8 %v804
      %v806 = vlaneseq
      %v807 = vshrl.u32 %v806, 7
      %v808 = vsub.s32 %v805, %v807
      %v809 = vrot.slane %v795, %v808
      %v810 = vcombine.high %v802, %v802
      %v811 = vcombine.high %v809, %v809
      %v812 = vcombine.high %v768, %v768
      %v814 = vunpack.c.l.s4 1983009808
      %v815 = vunpack.c.0.s8 %v814
      %v816 = vlaneseq
      %v817 = vshrl.u32 %v816, 7
      %v818 = vsub.s32 %v815, %v817
      %v819 = vrot.slane %v768, %v818
      %v821 = vunpack.c.l.s4 1983009808
      %v822 = vunpack.c.0.s8 %v821
      %v823 = vlaneseq
      %v824 = vshrl.u32 %v823, 7
      %v825 = vsub.s32 %v822, %v824
      %v826 = vrot.slane %v812, %v825
      %v827 = vcombine.high %v819, %v819
      %v828 = vcombine.high %v826, %v826
      %v830 = vunpack.c.l.s4 1983009808
      %v831 = vunpack.c.0.s8 %v830
      %v832 = vlaneseq
      %v833 = vshrl.u32 %v832, 7
      %v834 = vsub.s32 %v831, %v833
      %v835 = vrot.slane %v771, %v834
      %v836 = vcombine.high %v835, %v835
      %v837 = vcombine.low %v785, %v793
      %v838 = vcombine.low %v792, %v794
      %v840 = vunpack.c.l.s4 1983009808
      %v841 = vunpack.c.0.s8 %v840
      %v842 = vlaneseq
      %v843 = vshrl.u32 %v842, 7
      %v844 = vsub.s32 %v841, %v843
      %v845 = vrot.slane %v837, %v844
      %v847 = vunpack.c.l.s4 1983009808
      %v848 = vunpack.c.0.s8 %v847
      %v849 = vlaneseq
      %v850 = vshrl.u32 %v849, 7
      %v851 = vsub.s32 %v848, %v850
      %v852 = vrot.slane %v838, %v851
      %v853 = vcombine.low %v845, %v852
      %v854 = vcombine.low %v802, %v810
      %v856 = vunpack.c.l.s4 1983009808
      %v857 = vunpack.c.0.s8 %v856
      %v858 = vlaneseq
      %v859 = vshrl.u32 %v858, 7
      %v860 = vsub.s32 %v857, %v859
      %v861 = vrot.slane %v854, %v860
      %v863 = vunpack.c.l.s4 1983009808
      %v864 = vunpack.c.0.s8 %v863
      %v865 = vlaneseq
      %v866 = vshrl.u32 %v865, 7
      %v867 = vsub.s32 %v864, %v866
      %v868 = vrot.slane %v809, %v867
      %v869 = vcombine.low %v861, %v868
      %v870 = vcombine.low %v811, %v819
      %v871 = vcombine.low %v827, %v826
      %v873 = vunpack.c.l.s4 1983009808
      %v874 = vunpack.c.0.s8 %v873
      %v875 = vlaneseq
      %v876 = vshrl.u32 %v875, 7
      %v877 = vsub.s32 %v874, %v876
      %v878 = vrot.slane %v870, %v877
      %v880 = vunpack.c.l.s4 1983009808
      %v881 = vunpack.c.0.s8 %v880
      %v882 = vlaneseq
      %v883 = vshrl.u32 %v882, 7
      %v884 = vsub.s32 %v881, %v883
      %v885 = vrot.slane %v871, %v884
      %v886 = vcombine.low %v878, %v885
      %v887 = vcombine.low %v828, %v835
      %v889 = vunpack.c.l.s4 1983009808
      %v890 = vunpack.c.0.s8 %v889
      %v891 = vlaneseq
      %v892 = vshrl.u32 %v891, 7
      %v893 = vsub.s32 %v890, %v892
      %v894 = vrot.slane %v887, %v893
      %v896 = vunpack.c.l.s4 1983009808
      %v897 = vunpack.c.0.s8 %v896
      %v898 = vlaneseq
      %v899 = vshrl.u32 %v898, 7
      %v900 = vsub.s32 %v897, %v899
      %v901 = vrot.slane %v836, %v900
      %v902 = vcombine.low %v894, %v901
      %v907 = vsel %vm238, %v869, -inf
      %v908 = vmax.f32 %v853, %v907
      %v909 = vrot.slane %v908, 4
      %v910 = vmax.f32 %v908, %v909
      %v911 = vrot.slane %v910, 2
      %v912 = vmax.f32 %v910, %v911
      %v913 = vrot.slane %v912, 1
      %v914 = vmax.f32 %v912, %v913
      %v915 = vsel %vm238, %v902, -inf
      %v916 = vmax.f32 %v886, %v915
      %v917 = vrot.slane %v916, 4
      %v918 = vmax.f32 %v916, %v917
      %v919 = vrot.slane %v918, 2
      %v920 = vmax.f32 %v918, %v919
      %v921 = vrot.slane %v920, 1
      %v922 = vmax.f32 %v920, %v921
      %v923 = vld [vmem:[%s3] sm:$0x1]
      %v925 = vlaneseq
      %v926 = vshrl.u32 %v925, 7
      %v927 = vsub.s32 0, %v926
      %v928 = vrot.slane %v923, %v927
      %v930 = vadd.f32 %v914, %v928
      %v931 = vadd.f32 %v922, %v928
      %v932 = vmax.f32 %v930, 0.0
      %v933 = vmax.f32 %v931, 0.0
      %v934 = vld [vmem:[#allocation3] sm:$0xf]
      %v935 = vld [vmem:[#allocation3 + $0x4] sm:$0xf]
      %v936 = vld [vmem:[#allocation3 + $0x8] sm:$0xf]
      %v937 = vld [vmem:[#allocation3 + $0xc] sm:$0xf]
      %v938 = vld [vmem:[#allocation3 + $0x10] sm:$0xf]
      %v939 = vld [vmem:[#allocation3 + $0x14] sm:$0xf]
      %v940 = vld [vmem:[#allocation3 + $0x18] sm:$0xf]
      %v941 = vld [vmem:[#allocation3 + $0x1c] sm:$0xf]
      %v942 = vld [vmem:[#allocation3 + $0x20] sm:$0xf]
      %v943 = vld [vmem:[#allocation3 + $0x24] sm:$0xf]
      %v944 = vld [vmem:[#allocation3 + $0x28] sm:$0xf]
      %v945 = vld [vmem:[#allocation3 + $0x2c] sm:$0xf]
      %v946 = vld [vmem:[#allocation3 + $0x30] sm:$0xf]
      %v947 = vld [vmem:[#allocation3 + $0x34] sm:$0xf]
      %v948 = vld [vmem:[#allocation3 + $0x38] sm:$0xf]
      %v949 = vld [vmem:[#allocation3 + $0x3c] sm:$0xf]
      %v950 = vunpack.c.l.bf16 %v934
      %v951 = vunpack.c.l.bf16 %v935
      %v952 = vunpack.c.l.bf16 %v936
      %v953 = vunpack.c.l.bf16 %v937
      %v954 = vunpack.c.l.bf16 %v938
      %v955 = vunpack.c.l.bf16 %v939
      %v956 = vunpack.c.l.bf16 %v940
      %v957 = vunpack.c.l.bf16 %v941
      %v958 = vunpack.c.l.bf16 %v942
      %v959 = vunpack.c.l.bf16 %v943
      %v960 = vunpack.c.l.bf16 %v944
      %v961 = vunpack.c.l.bf16 %v945
      %v962 = vunpack.c.l.bf16 %v946
      %v963 = vunpack.c.l.bf16 %v947
      %v964 = vunpack.c.l.bf16 %v948
      %v965 = vunpack.c.l.bf16 %v949
      %v966 = vld [vmem:[%s6] sm:$0x1]
      %v968 = vlaneseq
      %v969 = vshrl.u32 %v968, 7
      %v970 = vsub.s32 0, %v969
      %v971 = vrot.slane %v966, %v970
      %v975 = vrot.slane %v933, 7
      %vm976 = vcmask 1041409
      %v977 = vsel %vm976, %v975, %v932
      %979 = vmatprep.subr.mxu0 0.0
      %980 = vmatpush1.msra.mxu0 %v950
      %981 = vmatprep.subr.mxu0 0.0
      %982 = vmatpush1.msra.mxu0 %v951
      %983 = vmatprep.subr.mxu0 0.0
      %984 = vmatpush1.msra.mxu0 %v952
      %985 = vmatprep.subr.mxu0 0.0
      %986 = vmatpush1.msra.mxu0 %v953
      %987 = vmatprep.subr.mxu0 0.0
      %988 = vmatpush1.msra.mxu0 %v954
      %989 = vmatprep.subr.mxu0 0.0
      %990 = vmatpush1.msra.mxu0 %v955
      %991 = vmatprep.subr.mxu0 0.0
      %992 = vmatpush1.msra.mxu0 %v956
      %993 = vmatprep.subr.mxu0 0.0
      %994 = vmatpush1.msra.mxu0 %v957
      %995 = vmatprep.subr.mxu0 0.0
      %996 = vmatpush1.msra.mxu0 %v958
      %997 = vmatprep.subr.mxu0 0.0
      %998 = vmatpush1.msra.mxu0 %v959
      %999 = vmatprep.subr.mxu0 0.0
      %1000 = vmatpush1.msra.mxu0 %v960
      %1001 = vmatprep.subr.mxu0 0.0
      %1002 = vmatpush1.msra.mxu0 %v961
      %1003 = vmatprep.subr.mxu0 0.0
      %1004 = vmatpush1.msra.mxu0 %v962
      %1005 = vmatprep.subr.mxu0 0.0
      %1006 = vmatpush1.msra.mxu0 %v963
      %1007 = vmatprep.subr.mxu0 0.0
      %1008 = vmatpush1.msra.mxu0 %v964
      %1009 = vmatprep.subr.mxu0 0.0
      %1010 = vmatpush1.msra.mxu0 %v965
      %1011 = vmatprep.subr.mxu0 0.0
      %1012 = vmatpush1.msra.mxu0 0.0
      %1013 = vmatprep.subr.mxu0 0.0
      %1014 = vmatpush1.msra.mxu0 0.0
      %1015 = vmatprep.subr.mxu0 0.0
      %1016 = vmatpush1.msra.mxu0 0.0
      %1017 = vmatprep.subr.mxu0 0.0
      %1018 = vmatpush1.msra.mxu0 0.0
      %1019 = vmatprep.subr.mxu0 0.0
      %1020 = vmatpush1.msra.mxu0 0.0
      %1021 = vmatprep.subr.mxu0 0.0
      %1022 = vmatpush1.msra.mxu0 0.0
      %1023 = vmatprep.subr.mxu0 0.0
      %1024 = vmatpush1.msra.mxu0 0.0
      %1025 = vmatprep.subr.mxu0 0.0
      %1026 = vmatpush1.msra.mxu0 0.0
      %1027 = vmatprep.subr.mxu0 0.0
      %1028 = vmatpush1.msra.mxu0 0.0
      %1029 = vmatprep.subr.mxu0 0.0
      %1030 = vmatpush1.msra.mxu0 0.0
      %1031 = vmatprep.subr.mxu0 0.0
      %1032 = vmatpush1.msra.mxu0 0.0
      %1033 = vmatprep.subr.mxu0 0.0
      %1034 = vmatpush1.msra.mxu0 0.0
      %1035 = vmatprep.subr.mxu0 0.0
      %1036 = vmatpush1.msra.mxu0 0.0
      %1037 = vmatprep.subr.mxu0 0.0
      %1038 = vmatpush1.msra.mxu0 0.0
      %1039 = vmatprep.subr.mxu0 0.0
      %1040 = vmatpush1.msra.mxu0 0.0
      %1041 = vmatprep.subr.mxu0 0.0
      %1042 = vmatpush1.msra.mxu0 0.0
      %1043 = vmatprep.mubr.f32.mxu0 0.0
      %1044 = vmatmul.mubr.f32.gmra.mrb[0].mxu0 %v977
      %v1045 = vpop.f32.mrb[0].mxu0
      %v1046 = vadd.f32 %v971, %v1045
      %v1047 = vpop.f32.mrb[0].mxu0
      %1048 = vdwg.mxu0
      %1049 = vst [vmem:[#allocation6] sm:$0x3] %v1046
    $region41: #{tpu_custom_call.1} parent=1 // pred_fallthru
      _
    // Predicated region
    $region42: #{tpu_custom_call.1} parent=1 // pred_check
      _
    $region43: #{tpu_custom_call.1} parent=1 // pred_check_branch
      %1051 = sbr.rel (0) target = $region45
    $region44: #{tpu_custom_call.1} parent=1 // pred_region
      %s1053 = ssub.s32 32, 32
      %1054 = vsyncadd [#allocation5], %s1053
      %s1056 = sshll.u32 [#allocation6], 4
      %s1057 = int_to_ptr.vmem [resolvable:$true] %s1056
      %1059 = dma.vmem_to_hbm [thread:$0]  %s1057, 32, %s7, [#allocation5]
    $region45: #{tpu_custom_call.1} parent=1 // pred_fallthru
      _
    // Predicated region
    $region46: #{tpu_custom_call.1} parent=1 // pred_check
      _
    $region47: #{tpu_custom_call.1} parent=1 // pred_check_branch
      %1061 = sbr.rel (0) target = $region49
    $region48: #{tpu_custom_call.1} parent=1 // pred_region
      %1062 = dma.done [#allocation5], 32
    $region49: #{tpu_custom_call.1} parent=1 // pred_fallthru
      _
    %1063 = vsyncpa [#allocation4], 1
    %1064 = vsyncpa [#allocation5], 1

</llo_original>
